<compile_context>
chip_gen: v7x
topology: tpu7x:2x2x1
jax: 0.10.0
libtpu: 0.0.40
codegen_flags: <defaults>
</compile_context>

<pallas_src>
import functools

import jax
import jax.numpy as jnp
from jax import lax
from jax.experimental import pallas as pl
from jax.experimental.pallas import tpu as pltpu


def behavioral_lstm_kernel(
    x_ref,         # (T*B, D)   time-major flattened input (row = t*B + b)
    wih0_ref,      # (D, 4H)    layer-0 input weights (pre-transposed)
    whh0_ref,      # (H, 4H)    layer-0 recurrent weights (pre-transposed)
    b0_ref,        # (1, 4H)    layer-0 bias (b_ih + b_hh), f32
    wih1_ref,      # (H, 4H)
    whh1_ref,      # (H, 4H)
    b1_ref,        # (1, 4H)
    wa1_ref,       # (H, H)     attention Linear(H, H) (pre-transposed)
    ba1_ref,       # (1, H)
    wa2_ref,       # (1, H)     attention Linear(H, 1) weight kept as a row
    ba2_ref,       # (1, 1)
    wf1_ref,       # (H, H//2)  fc1 (pre-transposed)
    bf1_ref,       # (1, H//2)
    wf2_ref,       # (H//2, C)  fc2 (pre-transposed)
    bf2_ref,       # (1, C)
    out_ref,       # (B, C)     logits
    attn_ref,      # (B, T)     attention weights, lane-dense
    pregates_ref,  # scratch (T*B, 4H) f32 — reused by both LSTM layers
    l0_ref,        # scratch (T*B, H)  f32 — layer-0 hidden states
    l1_ref,        # scratch (T*B, H)  f32 — layer-1 hidden states (lstm_out)
    *,
    seq_len,
    batch,
):
    T, B = seq_len, batch
    H = whh0_ref.shape[0]
    f32 = jnp.float32
    # Matmul operand dtype (f32, or bf16 on v6e/v7x). Elementwise gate math is
    # always f32.
    mm_dtype = whh0_ref.dtype

    # ---- hoisted, loop-invariant recurrent weights ----
    whh0 = whh0_ref[...]
    whh1 = whh1_ref[...]

    def run_layer(x_all, wih, bias, whh, out_h_ref):
        # Batched input->hidden matmul for every timestep at once: M = T*B rows
        # on the MXU, and it is off the serial recurrence critical path. The
        # (b_ih + b_hh) bias is folded in here, so the step body has no bias add.
        pregates_ref[...] = (
            jnp.dot(x_all, wih, preferred_element_type=f32) + bias
        )

        def step(t, carry):
            h, c = carry
            row = pl.multiple_of(t * B, B)
            gates = pregates_ref[pl.ds(row, B), :] + jnp.dot(
                h.astype(mm_dtype), whh, preferred_element_type=f32
            )  # (B, 4H), PyTorch gate order: i, f, g, o
            i = jax.nn.sigmoid(gates[:, 0 * H:1 * H])
            f = jax.nn.sigmoid(gates[:, 1 * H:2 * H])
            g = jnp.tanh(gates[:, 2 * H:3 * H])
            o = jax.nn.sigmoid(gates[:, 3 * H:4 * H])
            c = f * c + i * g
            h = o * jnp.tanh(c)
            out_h_ref[pl.ds(row, B), :] = h
            return (h, c)

        zero = jnp.zeros((B, H), f32)
        lax.fori_loop(0, T, step, (zero, zero))

    # ---- LSTM layer 0 ----
    run_layer(x_ref[...], wih0_ref[...], b0_ref[...], whh0, l0_ref)
    # ---- LSTM layer 1 (inter-layer dropout = identity in eval) ----
    run_layer(l0_ref[...].astype(mm_dtype), wih1_ref[...], b1_ref[...], whh1,
              l1_ref)

    # ---- attention scores: one batched matmul over all T*B rows ----
    l1_all = l1_ref[...]                                      # (T*B, H) f32
    hid = jnp.tanh(
        jnp.dot(l1_all.astype(mm_dtype), wa1_ref[...],
                preferred_element_type=f32) + ba1_ref[...]
    )                                                         # (T*B, H)
    # N=1 matmul replaced by a VPU multiply + lane reduce.
    wa2_row = wa2_ref[...].astype(f32)                        # (1, H)
    s = jnp.sum(hid * wa2_row, axis=-1, keepdims=True) + ba2_ref[...]  # (T*B,1)

    # Re-lay the scores lane-dense as (B, T): column t <- rows [t*B, (t+1)*B).
    scores_bt = jnp.concatenate(
        [s[t * B:(t + 1) * B, :] for t in range(T)], axis=1)  # (B, T)

    # ---- softmax over time (lane axis) ----
    m = jnp.max(scores_bt, axis=-1, keepdims=True)
    e = jnp.exp(scores_bt - m)
    attn_bt = e / jnp.sum(e, axis=-1, keepdims=True)          # (B, T)
    attn_ref[...] = attn_bt                                   # lane-dense store

    # ---- context vector: bounded per-timestep accumulation ----
    context = jnp.zeros((B, H), f32)
    for t in range(T):  # static unroll; keeps live vregs bounded
        context = context + attn_bt[:, t:t + 1] * l1_all[t * B:(t + 1) * B, :]

    # ---- MLP head (head dropout = identity in eval) ----
    h1 = jnp.maximum(
        jnp.dot(context.astype(mm_dtype), wf1_ref[...],
                preferred_element_type=f32) + bf1_ref[...],
        0.0,
    )                                                         # (B, H//2)
    out_ref[...] = (
        jnp.dot(h1.astype(mm_dtype), wf2_ref[...],
                preferred_element_type=f32) + bf2_ref[...]
    )                                                         # (B, C)


def behavioral_pattern_lstm_pallas(x, w, compute_dtype=jnp.float32):
    """x: (B, T, D) batch-first like the PyTorch module. Returns (logits, attn).

    compute_dtype controls the matmul operand dtype only (use jnp.bfloat16 on
    v6e/v7x for the fast MXU path); gate/elementwise math is always f32.
    """
    B, T, D = x.shape
    H = w["whh0_T"].shape[0]
    C = w["wf2_T"].shape[1]
    cd = compute_dtype
    f32 = jnp.float32

    # Time-major, flattened (T*B, D). Transpose/reshape runs in XLA outside the
    # kernel; inside the kernel everything is flat 2-D (no in-kernel reshapes).
    x_flat = jnp.transpose(x, (1, 0, 2)).reshape(T * B, D).astype(cd)

    vmem = pl.BlockSpec(memory_space=pltpu.MemorySpace.VMEM)
    args = (
        x_flat,
        w["wih0_T"].astype(cd), w["whh0_T"].astype(cd), w["b0"].astype(f32),
        w["wih1_T"].astype(cd), w["whh1_T"].astype(cd), w["b1"].astype(f32),
        w["wa1_T"].astype(cd), w["ba1"].astype(f32),
        w["wa2"].astype(f32), w["ba2"].astype(f32),
        w["wf1_T"].astype(cd), w["bf1"].astype(f32),
        w["wf2_T"].astype(cd), w["bf2"].astype(f32),
    )
    kernel = functools.partial(behavioral_lstm_kernel, seq_len=T, batch=B)
    # Note: for production shapes on v7x, add a parallel batch grid axis (2 TCs)
    # and stream x in time chunks; at B=2/T=8 a single gridless call is optimal.
    logits, attn_bt = pl.pallas_call(
        kernel,
        out_shape=(
            jax.ShapeDtypeStruct((B, C), f32),
            jax.ShapeDtypeStruct((B, T), f32),
        ),
        in_specs=[vmem] * len(args),
        out_specs=(vmem, vmem),
        scratch_shapes=[
            pltpu.VMEM((T * B, 4 * H), f32),   # pregates (shared by both layers)
            pltpu.VMEM((T * B, H), f32),       # layer-0 hidden states
            pltpu.VMEM((T * B, H), f32),       # layer-1 hidden states (lstm_out)
        ],
    )(*args)
    attn = attn_bt[:, :, None]                 # (B, T, 1) — PyTorch convention
    return logits, attn


def reference_forward(x, w):
    """Pure-JAX reference matching the PyTorch forward (eval mode)."""
    B, T, _ = x.shape
    H = w["whh0_T"].shape[0]

    def run_layer(inp, wih_T, whh_T, b):
        h = jnp.zeros((B, H), jnp.float32)
        c = jnp.zeros((B, H), jnp.float32)
        outs = []
        for t in range(T):
            gates = inp[:, t, :] @ wih_T + h @ whh_T + b
            i = jax.nn.sigmoid(gates[:, :H])
            f = jax.nn.sigmoid(gates[:, H:2 * H])
            g = jnp.tanh(gates[:, 2 * H:3 * H])
            o = jax.nn.sigmoid(gates[:, 3 * H:])
            c = f * c + i * g
            h = o * jnp.tanh(c)
            outs.append(h)
        return jnp.stack(outs, axis=1)                        # (B, T, H)

    l0 = run_layer(x, w["wih0_T"], w["whh0_T"], w["b0"])
    l1 = run_layer(l0, w["wih1_T"], w["whh1_T"], w["b1"])
    hid = jnp.tanh(l1 @ w["wa1_T"] + w["ba1"])                # (B, T, H)
    scores = jnp.sum(hid * w["wa2"], axis=-1, keepdims=True) + w["ba2"]
    attn = jax.nn.softmax(scores, axis=1)                     # (B, T, 1)
    ctx = jnp.sum(attn * l1, axis=1)                          # (B, H)
    h1 = jax.nn.relu(ctx @ w["wf1_T"] + w["bf1"])
    return h1 @ w["wf2_T"] + w["bf2"], attn


def init_params(key, input_size, hidden_size, num_classes):
    D, H, C = input_size, hidden_size, num_classes
    H2 = H // 2
    ks = jax.random.split(key, 16)

    def u(k, shape, scale):
        return jax.random.uniform(k, shape, jnp.float32, -scale, scale)

    s = float(1.0 / jnp.sqrt(H))
    s2 = float(1.0 / jnp.sqrt(H2))
    return {
        # weights stored pre-transposed (fan_in, fan_out) for in-kernel dots;
        # wa2 (the Linear(H,1) weight) is kept as a (1, H) row for lane reduce.
        "wih0_T": u(ks[0], (D, 4 * H), s),
        "whh0_T": u(ks[1], (H, 4 * H), s),
        "b0": u(ks[2], (1, 4 * H), s) + u(ks[3], (1, 4 * H), s),  # b_ih + b_hh
        "wih1_T": u(ks[4], (H, 4 * H), s),
        "whh1_T": u(ks[5], (H, 4 * H), s),
        "b1": u(ks[6], (1, 4 * H), s) + u(ks[7], (1, 4 * H), s),
        "wa1_T": u(ks[8], (H, H), s),
        "ba1": u(ks[9], (1, H), s),
        "wa2": u(ks[10], (1, H), s),
        "ba2": u(ks[11], (1, 1), s),
        "wf1_T": u(ks[12], (H, H2), s),
        "bf1": u(ks[13], (1, H2), s),
        "wf2_T": u(ks[14], (H2, C), s2),
        "bf2": u(ks[15], (1, C), s2),
    }


if __name__ == "__main__":
    B, T, D, H, C = 2, 8, 16, 32, 10
    key = jax.random.PRNGKey(0)
    kx, kp = jax.random.split(key)
    x = jax.random.normal(kx, (B, T, D), jnp.float32)
    params = init_params(kp, D, H, C)

    ref_logits, ref_attn = reference_forward(x, params)

    # f32 matmul operands (v5e-safe path).
    logits, attn = jax.jit(behavioral_pattern_lstm_pallas)(x, params)
    jax.block_until_ready((logits, attn))
    assert logits.shape == (B, C) and attn.shape == (B, T, 1)
    assert jnp.allclose(logits, ref_logits, atol=2e-2, rtol=2e-2)
    assert jnp.allclose(attn, ref_attn, atol=2e-2, rtol=2e-2)

    # bf16 matmul operands (v6e / v7x fast path); gate math stays in f32.
    lstm_bf16 = jax.jit(functools.partial(
        behavioral_pattern_lstm_pallas, compute_dtype=jnp.bfloat16))
    logits_bf16, attn_bf16 = lstm_bf16(x, params)
    jax.block_until_ready((logits_bf16, attn_bf16))
    assert jnp.allclose(logits_bf16, ref_logits, atol=1e-1, rtol=1e-1)
    assert jnp.allclose(attn_bf16, ref_attn, atol=1e-1, rtol=1e-1)

    print("KERNEL_OK")
</pallas_src>

<mosaic_0001>
module attributes {stable_mosaic.version = 11 : i64} {
  func.func @behavioral_lstm_kernel(%arg0: memref<16x16xf32, #tpu.memory_space<vmem>>, %arg1: memref<16x128xf32, #tpu.memory_space<vmem>>, %arg2: memref<32x128xf32, #tpu.memory_space<vmem>>, %arg3: memref<1x128xf32, #tpu.memory_space<vmem>>, %arg4: memref<32x128xf32, #tpu.memory_space<vmem>>, %arg5: memref<32x128xf32, #tpu.memory_space<vmem>>, %arg6: memref<1x128xf32, #tpu.memory_space<vmem>>, %arg7: memref<32x32xf32, #tpu.memory_space<vmem>>, %arg8: memref<1x32xf32, #tpu.memory_space<vmem>>, %arg9: memref<1x32xf32, #tpu.memory_space<vmem>>, %arg10: memref<1x1xf32, #tpu.memory_space<vmem>>, %arg11: memref<32x16xf32, #tpu.memory_space<vmem>>, %arg12: memref<1x16xf32, #tpu.memory_space<vmem>>, %arg13: memref<16x10xf32, #tpu.memory_space<vmem>>, %arg14: memref<1x10xf32, #tpu.memory_space<vmem>>, %arg15: memref<2x10xf32, #tpu.memory_space<vmem>>, %arg16: memref<2x8xf32, #tpu.memory_space<vmem>>, %arg17: memref<16x128xf32, #tpu.memory_space<vmem>>, %arg18: memref<16x32xf32, #tpu.memory_space<vmem>>, %arg19: memref<16x32xf32, #tpu.memory_space<vmem>>) attributes {dimension_semantics = [], scalar_prefetch = 0 : i64, scratch_operands = 3 : i64, tpu.core_type = #tpu.core_type<tc>} {
    %c0 = arith.constant 0 : index
    %c0_0 = arith.constant 0 : index
    %0 = vector.load %arg2[%c0, %c0_0] : memref<32x128xf32, #tpu.memory_space<vmem>>, vector<32x128xf32>
    %c0_1 = arith.constant 0 : index
    %c0_2 = arith.constant 0 : index
    %1 = vector.load %arg5[%c0_1, %c0_2] : memref<32x128xf32, #tpu.memory_space<vmem>>, vector<32x128xf32>
    %c0_3 = arith.constant 0 : index
    %c0_4 = arith.constant 0 : index
    %2 = vector.load %arg0[%c0_3, %c0_4] : memref<16x16xf32, #tpu.memory_space<vmem>>, vector<16x16xf32>
    %c0_5 = arith.constant 0 : index
    %c0_6 = arith.constant 0 : index
    %3 = vector.load %arg1[%c0_5, %c0_6] : memref<16x128xf32, #tpu.memory_space<vmem>>, vector<16x128xf32>
    %c0_7 = arith.constant 0 : index
    %c0_8 = arith.constant 0 : index
    %4 = vector.load %arg3[%c0_7, %c0_8] : memref<1x128xf32, #tpu.memory_space<vmem>>, vector<1x128xf32>
    %cst = arith.constant dense<0.000000e+00> : vector<16x128xf32>
    %5 = tpu.matmul %2, %3, %cst {dimension_numbers = #tpu.dot_dimension_numbers<[1], [0], [0], [1], [0, 0, 1, 1], [], []>} : vector<16x16xf32>, vector<16x128xf32>, vector<16x128xf32> -> vector<16x128xf32>
    %6 = vector.broadcast %4 : vector<1x128xf32> to vector<16x128xf32>
    %7 = arith.addf %5, %6 : vector<16x128xf32>
    %c0_9 = arith.constant 0 : index
    %c0_10 = arith.constant 0 : index
    %8 = vector.load %arg17[%c0_9, %c0_10] : memref<16x128xf32, #tpu.memory_space<vmem>>, vector<16x128xf32>
    tpu.vector_store %arg17[%c0_9, %c0_10], %7 {strides = array<i32>} : memref<16x128xf32, #tpu.memory_space<vmem>>, vector<16x128xf32>,
    %cst_11 = arith.constant 0.000000e+00 : f32
    %9 = vector.broadcast %cst_11 : f32 to vector<2x32xf32>
    %c0_i32 = arith.constant 0 : i32
    %c8_i32 = arith.constant 8 : i32
    %10 = arith.addi %c0_i32, %c8_i32 : i32
    %c1_i32 = arith.constant 1 : i32
    %11:2 = scf.for %arg20 = %c0_i32 to %10 step %c1_i32 iter_args(%arg21 = %9, %arg22 = %9) -> (vector<2x32xf32>, vector<2x32xf32>)  : i32 {
      %c2_i32 = arith.constant 2 : i32
      %110 = arith.muli %arg20, %c2_i32 : i32
      %111 = tpu.assume_multiple %110, 2 : i32
      %112 = arith.index_cast %111 : i32 to index
      %c0_57 = arith.constant 0 : index
      %113 = vector.load %arg17[%112, %c0_57] : memref<16x128xf32, #tpu.memory_space<vmem>>, vector<2x128xf32>
      %cst_58 = arith.constant dense<0.000000e+00> : vector<2x128xf32>
      %114 = tpu.matmul %arg21, %0, %cst_58 {dimension_numbers = #tpu.dot_dimension_numbers<[1], [0], [0], [1], [0, 0, 1, 1], [], []>} : vector<2x32xf32>, vector<32x128xf32>, vector<2x128xf32> -> vector<2x128xf32>
      %115 = arith.addf %113, %114 : vector<2x128xf32>
      %116 = vector.extract_strided_slice %115 {offsets = [0, 0], sizes = [2, 32], strides = [1, 1]} : vector<2x128xf32> to vector<2x32xf32>
      %117 = arith.negf %116 : vector<2x32xf32>
      %118 = math.exp %117 : vector<2x32xf32>
      %cst_59 = arith.constant 1.000000e+00 : f32
      %119 = vector.broadcast %cst_59 : f32 to vector<2x32xf32>
      %120 = arith.addf %119, %118 : vector<2x32xf32>
      %121 = arith.divf %119, %120 : vector<2x32xf32>
      %122 = vector.extract_strided_slice %115 {offsets = [0, 32], sizes = [2, 32], strides = [1, 1]} : vector<2x128xf32> to vector<2x32xf32>
      %123 = arith.negf %122 : vector<2x32xf32>
      %124 = math.exp %123 : vector<2x32xf32>
      %cst_60 = arith.constant 1.000000e+00 : f32
      %125 = vector.broadcast %cst_60 : f32 to vector<2x32xf32>
      %126 = arith.addf %125, %124 : vector<2x32xf32>
      %127 = arith.divf %125, %126 : vector<2x32xf32>
      %128 = vector.extract_strided_slice %115 {offsets = [0, 64], sizes = [2, 32], strides = [1, 1]} : vector<2x128xf32> to vector<2x32xf32>
      %129 = math.tanh %128 : vector<2x32xf32>
      %130 = vector.extract_strided_slice %115 {offsets = [0, 96], sizes = [2, 32], strides = [1, 1]} : vector<2x128xf32> to vector<2x32xf32>
      %131 = arith.negf %130 : vector<2x32xf32>
      %132 = math.exp %131 : vector<2x32xf32>
      %cst_61 = arith.constant 1.000000e+00 : f32
      %133 = vector.broadcast %cst_61 : f32 to vector<2x32xf32>
      %134 = arith.addf %133, %132 : vector<2x32xf32>
      %135 = arith.divf %133, %134 : vector<2x32xf32>
      %136 = arith.mulf %127, %arg22 : vector<2x32xf32>
      %137 = arith.mulf %121, %129 : vector<2x32xf32>
      %138 = arith.addf %136, %137 : vector<2x32xf32>
      %139 = math.tanh %138 : vector<2x32xf32>
      %140 = arith.mulf %135, %139 : vector<2x32xf32>
      %141 = arith.index_cast %111 : i32 to index
      %c0_62 = arith.constant 0 : index
      %142 = vector.load %arg18[%141, %c0_62] : memref<16x32xf32, #tpu.memory_space<vmem>>, vector<2x32xf32>
      tpu.vector_store %arg18[%141, %c0_62], %140 {strides = array<i32>} : memref<16x32xf32, #tpu.memory_space<vmem>>, vector<2x32xf32>,
      scf.yield %140, %138 : vector<2x32xf32>, vector<2x32xf32>
    }
    %c8_i32_12 = arith.constant 8 : i32
    %c0_13 = arith.constant 0 : index
    %c0_14 = arith.constant 0 : index
    %12 = vector.load %arg18[%c0_13, %c0_14] : memref<16x32xf32, #tpu.memory_space<vmem>>, vector<16x32xf32>
    %c0_15 = arith.constant 0 : index
    %c0_16 = arith.constant 0 : index
    %13 = vector.load %arg4[%c0_15, %c0_16] : memref<32x128xf32, #tpu.memory_space<vmem>>, vector<32x128xf32>
    %c0_17 = arith.constant 0 : index
    %c0_18 = arith.constant 0 : index
    %14 = vector.load %arg6[%c0_17, %c0_18] : memref<1x128xf32, #tpu.memory_space<vmem>>, vector<1x128xf32>
    %cst_19 = arith.constant dense<0.000000e+00> : vector<16x128xf32>
    %15 = tpu.matmul %12, %13, %cst_19 {dimension_numbers = #tpu.dot_dimension_numbers<[1], [0], [0], [1], [0, 0, 1, 1], [], []>} : vector<16x32xf32>, vector<32x128xf32>, vector<16x128xf32> -> vector<16x128xf32>
    %16 = vector.broadcast %14 : vector<1x128xf32> to vector<16x128xf32>
    %17 = arith.addf %15, %16 : vector<16x128xf32>
    %c0_20 = arith.constant 0 : index
    %c0_21 = arith.constant 0 : index
    %18 = vector.load %arg17[%c0_20, %c0_21] : memref<16x128xf32, #tpu.memory_space<vmem>>, vector<16x128xf32>
    tpu.vector_store %arg17[%c0_20, %c0_21], %17 {strides = array<i32>} : memref<16x128xf32, #tpu.memory_space<vmem>>, vector<16x128xf32>,
    %cst_22 = arith.constant 0.000000e+00 : f32
    %19 = vector.broadcast %cst_22 : f32 to vector<2x32xf32>
    %c0_i32_23 = arith.constant 0 : i32
    %c8_i32_24 = arith.constant 8 : i32
    %20 = arith.addi %c0_i32_23, %c8_i32_24 : i32
    %c1_i32_25 = arith.constant 1 : i32
    %21:2 = scf.for %arg20 = %c0_i32_23 to %20 step %c1_i32_25 iter_args(%arg21 = %19, %arg22 = %19) -> (vector<2x32xf32>, vector<2x32xf32>)  : i32 {
      %c2_i32 = arith.constant 2 : i32
      %110 = arith.muli %arg20, %c2_i32 : i32
      %111 = tpu.assume_multiple %110, 2 : i32
      %112 = arith.index_cast %111 : i32 to index
      %c0_57 = arith.constant 0 : index
      %113 = vector.load %arg17[%112, %c0_57] : memref<16x128xf32, #tpu.memory_space<vmem>>, vector<2x128xf32>
      %cst_58 = arith.constant dense<0.000000e+00> : vector<2x128xf32>
      %114 = tpu.matmul %arg21, %1, %cst_58 {dimension_numbers = #tpu.dot_dimension_numbers<[1], [0], [0], [1], [0, 0, 1, 1], [], []>} : vector<2x32xf32>, vector<32x128xf32>, vector<2x128xf32> -> vector<2x128xf32>
      %115 = arith.addf %113, %114 : vector<2x128xf32>
      %116 = vector.extract_strided_slice %115 {offsets = [0, 0], sizes = [2, 32], strides = [1, 1]} : vector<2x128xf32> to vector<2x32xf32>
      %117 = arith.negf %116 : vector<2x32xf32>
      %118 = math.exp %117 : vector<2x32xf32>
      %cst_59 = arith.constant 1.000000e+00 : f32
      %119 = vector.broadcast %cst_59 : f32 to vector<2x32xf32>
      %120 = arith.addf %119, %118 : vector<2x32xf32>
      %121 = arith.divf %119, %120 : vector<2x32xf32>
      %122 = vector.extract_strided_slice %115 {offsets = [0, 32], sizes = [2, 32], strides = [1, 1]} : vector<2x128xf32> to vector<2x32xf32>
      %123 = arith.negf %122 : vector<2x32xf32>
      %124 = math.exp %123 : vector<2x32xf32>
      %cst_60 = arith.constant 1.000000e+00 : f32
      %125 = vector.broadcast %cst_60 : f32 to vector<2x32xf32>
      %126 = arith.addf %125, %124 : vector<2x32xf32>
      %127 = arith.divf %125, %126 : vector<2x32xf32>
      %128 = vector.extract_strided_slice %115 {offsets = [0, 64], sizes = [2, 32], strides = [1, 1]} : vector<2x128xf32> to vector<2x32xf32>
      %129 = math.tanh %128 : vector<2x32xf32>
      %130 = vector.extract_strided_slice %115 {offsets = [0, 96], sizes = [2, 32], strides = [1, 1]} : vector<2x128xf32> to vector<2x32xf32>
      %131 = arith.negf %130 : vector<2x32xf32>
      %132 = math.exp %131 : vector<2x32xf32>
      %cst_61 = arith.constant 1.000000e+00 : f32
      %133 = vector.broadcast %cst_61 : f32 to vector<2x32xf32>
      %134 = arith.addf %133, %132 : vector<2x32xf32>
      %135 = arith.divf %133, %134 : vector<2x32xf32>
      %136 = arith.mulf %127, %arg22 : vector<2x32xf32>
      %137 = arith.mulf %121, %129 : vector<2x32xf32>
      %138 = arith.addf %136, %137 : vector<2x32xf32>
      %139 = math.tanh %138 : vector<2x32xf32>
      %140 = arith.mulf %135, %139 : vector<2x32xf32>
      %141 = arith.index_cast %111 : i32 to index
      %c0_62 = arith.constant 0 : index
      %142 = vector.load %arg19[%141, %c0_62] : memref<16x32xf32, #tpu.memory_space<vmem>>, vector<2x32xf32>
      tpu.vector_store %arg19[%141, %c0_62], %140 {strides = array<i32>} : memref<16x32xf32, #tpu.memory_space<vmem>>, vector<2x32xf32>,
      scf.yield %140, %138 : vector<2x32xf32>, vector<2x32xf32>
    }
    %c8_i32_26 = arith.constant 8 : i32
    %c0_27 = arith.constant 0 : index
    %c0_28 = arith.constant 0 : index
    %22 = vector.load %arg19[%c0_27, %c0_28] : memref<16x32xf32, #tpu.memory_space<vmem>>, vector<16x32xf32>
    %c0_29 = arith.constant 0 : index
    %c0_30 = arith.constant 0 : index
    %23 = vector.load %arg7[%c0_29, %c0_30] : memref<32x32xf32, #tpu.memory_space<vmem>>, vector<32x32xf32>
    %cst_31 = arith.constant dense<0.000000e+00> : vector<16x32xf32>
    %24 = tpu.matmul %22, %23, %cst_31 {dimension_numbers = #tpu.dot_dimension_numbers<[1], [0], [0], [1], [0, 0, 1, 1], [], []>} : vector<16x32xf32>, vector<32x32xf32>, vector<16x32xf32> -> vector<16x32xf32>
    %c0_32 = arith.constant 0 : index
    %c0_33 = arith.constant 0 : index
    %25 = vector.load %arg8[%c0_32, %c0_33] : memref<1x32xf32, #tpu.memory_space<vmem>>, vector<1x32xf32>
    %26 = vector.broadcast %25 : vector<1x32xf32> to vector<16x32xf32>
    %27 = arith.addf %24, %26 : vector<16x32xf32>
    %28 = math.tanh %27 : vector<16x32xf32>
    %c0_34 = arith.constant 0 : index
    %c0_35 = arith.constant 0 : index
    %29 = vector.load %arg9[%c0_34, %c0_35] : memref<1x32xf32, #tpu.memory_space<vmem>>, vector<1x32xf32>
    %30 = vector.broadcast %29 : vector<1x32xf32> to vector<16x32xf32>
    %31 = arith.mulf %28, %30 : vector<16x32xf32>
    %cst_36 = arith.constant dense<0.000000e+00> : vector<16xf32>
    %32 = vector.multi_reduction <add>, %31, %cst_36 [1] : vector<16x32xf32> to vector<16xf32>
    %33 = vector.shape_cast %32 : vector<16xf32> to vector<16x1xf32>
    %c0_37 = arith.constant 0 : index
    %c0_38 = arith.constant 0 : index
    %34 = vector.load %arg10[%c0_37, %c0_38] : memref<1x1xf32, #tpu.memory_space<vmem>>, vector<1x1xf32>
    %35 = vector.broadcast %34 : vector<1x1xf32> to vector<16x1xf32>
    %36 = arith.addf %33, %35 : vector<16x1xf32>
    %37 = vector.extract_strided_slice %36 {offsets = [0, 0], sizes = [2, 1], strides = [1, 1]} : vector<16x1xf32> to vector<2x1xf32>
    %38 = vector.extract_strided_slice %36 {offsets = [2, 0], sizes = [2, 1], strides = [1, 1]} : vector<16x1xf32> to vector<2x1xf32>
    %39 = vector.extract_strided_slice %36 {offsets = [4, 0], sizes = [2, 1], strides = [1, 1]} : vector<16x1xf32> to vector<2x1xf32>
    %40 = vector.extract_strided_slice %36 {offsets = [6, 0], sizes = [2, 1], strides = [1, 1]} : vector<16x1xf32> to vector<2x1xf32>
    %41 = vector.extract_strided_slice %36 {offsets = [8, 0], sizes = [2, 1], strides = [1, 1]} : vector<16x1xf32> to vector<2x1xf32>
    %42 = vector.extract_strided_slice %36 {offsets = [10, 0], sizes = [2, 1], strides = [1, 1]} : vector<16x1xf32> to vector<2x1xf32>
    %43 = vector.extract_strided_slice %36 {offsets = [12, 0], sizes = [2, 1], strides = [1, 1]} : vector<16x1xf32> to vector<2x1xf32>
    %44 = vector.extract_strided_slice %36 {offsets = [14, 0], sizes = [2, 1], strides = [1, 1]} : vector<16x1xf32> to vector<2x1xf32>
    %45 = tpu.concatenate %37, %38, %39, %40, %41, %42, %43, %44 in 1 : vector<2x1xf32>, vector<2x1xf32>, vector<2x1xf32>, vector<2x1xf32>, vector<2x1xf32>, vector<2x1xf32>, vector<2x1xf32>, vector<2x1xf32> -> vector<2x8xf32>
    %cst_39 = arith.constant dense<0xFF800000> : vector<2xf32>
    %46 = vector.multi_reduction <maximumf>, %45, %cst_39 [1] : vector<2x8xf32> to vector<2xf32>
    %47 = vector.shape_cast %46 : vector<2xf32> to vector<2x1xf32>
    %48 = vector.broadcast %47 : vector<2x1xf32> to vector<2x8xf32>
    %49 = arith.subf %45, %48 : vector<2x8xf32>
    %50 = math.exp %49 : vector<2x8xf32>
    %cst_40 = arith.constant dense<0.000000e+00> : vector<2xf32>
    %51 = vector.multi_reduction <add>, %50, %cst_40 [1] : vector<2x8xf32> to vector<2xf32>
    %52 = vector.shape_cast %51 : vector<2xf32> to vector<2x1xf32>
    %53 = vector.broadcast %52 : vector<2x1xf32> to vector<2x8xf32>
    %54 = arith.divf %50, %53 : vector<2x8xf32>
    %c0_41 = arith.constant 0 : index
    %c0_42 = arith.constant 0 : index
    %55 = vector.load %arg16[%c0_41, %c0_42] : memref<2x8xf32, #tpu.memory_space<vmem>>, vector<2x8xf32>
    tpu.vector_store %arg16[%c0_41, %c0_42], %54 {strides = array<i32>} : memref<2x8xf32, #tpu.memory_space<vmem>>, vector<2x8xf32>,
    %cst_43 = arith.constant 0.000000e+00 : f32
    %56 = vector.broadcast %cst_43 : f32 to vector<2x32xf32>
    %57 = vector.extract_strided_slice %54 {offsets = [0, 0], sizes = [2, 1], strides = [1, 1]} : vector<2x8xf32> to vector<2x1xf32>
    %58 = vector.extract_strided_slice %22 {offsets = [0, 0], sizes = [2, 32], strides = [1, 1]} : vector<16x32xf32> to vector<2x32xf32>
    %59 = vector.broadcast %57 : vector<2x1xf32> to vector<2x32xf32>
    %60 = arith.mulf %59, %58 : vector<2x32xf32>
    %61 = arith.addf %56, %60 : vector<2x32xf32>
    %62 = vector.extract_strided_slice %54 {offsets = [0, 1], sizes = [2, 1], strides = [1, 1]} : vector<2x8xf32> to vector<2x1xf32>
    %63 = vector.extract_strided_slice %22 {offsets = [2, 0], sizes = [2, 32], strides = [1, 1]} : vector<16x32xf32> to vector<2x32xf32>
    %64 = vector.broadcast %62 : vector<2x1xf32> to vector<2x32xf32>
    %65 = arith.mulf %64, %63 : vector<2x32xf32>
    %66 = arith.addf %61, %65 : vector<2x32xf32>
    %67 = vector.extract_strided_slice %54 {offsets = [0, 2], sizes = [2, 1], strides = [1, 1]} : vector<2x8xf32> to vector<2x1xf32>
    %68 = vector.extract_strided_slice %22 {offsets = [4, 0], sizes = [2, 32], strides = [1, 1]} : vector<16x32xf32> to vector<2x32xf32>
    %69 = vector.broadcast %67 : vector<2x1xf32> to vector<2x32xf32>
    %70 = arith.mulf %69, %68 : vector<2x32xf32>
    %71 = arith.addf %66, %70 : vector<2x32xf32>
    %72 = vector.extract_strided_slice %54 {offsets = [0, 3], sizes = [2, 1], strides = [1, 1]} : vector<2x8xf32> to vector<2x1xf32>
    %73 = vector.extract_strided_slice %22 {offsets = [6, 0], sizes = [2, 32], strides = [1, 1]} : vector<16x32xf32> to vector<2x32xf32>
    %74 = vector.broadcast %72 : vector<2x1xf32> to vector<2x32xf32>
    %75 = arith.mulf %74, %73 : vector<2x32xf32>
    %76 = arith.addf %71, %75 : vector<2x32xf32>
    %77 = vector.extract_strided_slice %54 {offsets = [0, 4], sizes = [2, 1], strides = [1, 1]} : vector<2x8xf32> to vector<2x1xf32>
    %78 = vector.extract_strided_slice %22 {offsets = [8, 0], sizes = [2, 32], strides = [1, 1]} : vector<16x32xf32> to vector<2x32xf32>
    %79 = vector.broadcast %77 : vector<2x1xf32> to vector<2x32xf32>
    %80 = arith.mulf %79, %78 : vector<2x32xf32>
    %81 = arith.addf %76, %80 : vector<2x32xf32>
    %82 = vector.extract_strided_slice %54 {offsets = [0, 5], sizes = [2, 1], strides = [1, 1]} : vector<2x8xf32> to vector<2x1xf32>
    %83 = vector.extract_strided_slice %22 {offsets = [10, 0], sizes = [2, 32], strides = [1, 1]} : vector<16x32xf32> to vector<2x32xf32>
    %84 = vector.broadcast %82 : vector<2x1xf32> to vector<2x32xf32>
    %85 = arith.mulf %84, %83 : vector<2x32xf32>
    %86 = arith.addf %81, %85 : vector<2x32xf32>
    %87 = vector.extract_strided_slice %54 {offsets = [0, 6], sizes = [2, 1], strides = [1, 1]} : vector<2x8xf32> to vector<2x1xf32>
    %88 = vector.extract_strided_slice %22 {offsets = [12, 0], sizes = [2, 32], strides = [1, 1]} : vector<16x32xf32> to vector<2x32xf32>
    %89 = vector.broadcast %87 : vector<2x1xf32> to vector<2x32xf32>
    %90 = arith.mulf %89, %88 : vector<2x32xf32>
    %91 = arith.addf %86, %90 : vector<2x32xf32>
    %92 = vector.extract_strided_slice %54 {offsets = [0, 7], sizes = [2, 1], strides = [1, 1]} : vector<2x8xf32> to vector<2x1xf32>
    %93 = vector.extract_strided_slice %22 {offsets = [14, 0], sizes = [2, 32], strides = [1, 1]} : vector<16x32xf32> to vector<2x32xf32>
    %94 = vector.broadcast %92 : vector<2x1xf32> to vector<2x32xf32>
    %95 = arith.mulf %94, %93 : vector<2x32xf32>
    %96 = arith.addf %91, %95 : vector<2x32xf32>
    %c0_44 = arith.constant 0 : index
    %c0_45 = arith.constant 0 : index
    %97 = vector.load %arg11[%c0_44, %c0_45] : memref<32x16xf32, #tpu.memory_space<vmem>>, vector<32x16xf32>
    %cst_46 = arith.constant dense<0.000000e+00> : vector<2x16xf32>
    %98 = tpu.matmul %96, %97, %cst_46 {dimension_numbers = #tpu.dot_dimension_numbers<[1], [0], [0], [1], [0, 0, 1, 1], [], []>} : vector<2x32xf32>, vector<32x16xf32>, vector<2x16xf32> -> vector<2x16xf32>
    %c0_47 = arith.constant 0 : index
    %c0_48 = arith.constant 0 : index
    %99 = vector.load %arg12[%c0_47, %c0_48] : memref<1x16xf32, #tpu.memory_space<vmem>>, vector<1x16xf32>
    %100 = vector.broadcast %99 : vector<1x16xf32> to vector<2x16xf32>
    %101 = arith.addf %98, %100 : vector<2x16xf32>
    %cst_49 = arith.constant 0.000000e+00 : f32
    %102 = vector.broadcast %cst_49 : f32 to vector<2x16xf32>
    %103 = arith.maximumf %101, %102 : vector<2x16xf32>
    %c0_50 = arith.constant 0 : index
    %c0_51 = arith.constant 0 : index
    %104 = vector.load %arg13[%c0_50, %c0_51] : memref<16x10xf32, #tpu.memory_space<vmem>>, vector<16x10xf32>
    %cst_52 = arith.constant dense<0.000000e+00> : vector<2x10xf32>
    %105 = tpu.matmul %103, %104, %cst_52 {dimension_numbers = #tpu.dot_dimension_numbers<[1], [0], [0], [1], [0, 0, 1, 1], [], []>} : vector<2x16xf32>, vector<16x10xf32>, vector<2x10xf32> -> vector<2x10xf32>
    %c0_53 = arith.constant 0 : index
    %c0_54 = arith.constant 0 : index
    %106 = vector.load %arg14[%c0_53, %c0_54] : memref<1x10xf32, #tpu.memory_space<vmem>>, vector<1x10xf32>
    %107 = vector.broadcast %106 : vector<1x10xf32> to vector<2x10xf32>
    %108 = arith.addf %105, %107 : vector<2x10xf32>
    %c0_55 = arith.constant 0 : index
    %c0_56 = arith.constant 0 : index
    %109 = vector.load %arg15[%c0_55, %c0_56] : memref<2x10xf32, #tpu.memory_space<vmem>>, vector<2x10xf32>
    tpu.vector_store %arg15[%c0_55, %c0_56], %108 {strides = array<i32>} : memref<2x10xf32, #tpu.memory_space<vmem>>, vector<2x10xf32>,
    return
  }
}

</mosaic_0001>

<llo_original>
// kernel: behavioral_pattern_lstm_pallas.1
$region0: #{behavioral_pattern_lstm_pallas.1}
  #allocation0 [shape = 'u32[]', space=smem, size = 0x4, offset = 0x4, fixed_abs, tag = 'smem constant byte address 0x4 - core index']
  #allocation1 [shape = 'u32[144,128]{1,0:T(1,128)}', space=vmem, size = 0x12000, scoped, tag = 'internal scratch']
  #allocation2 [shape = 'f32[16,128]{1,0:T(8,128)}', space=vmem, size = 0x2000, scoped, tag = 'scratch operand']
  #allocation3 [shape = 'f32[16,32]{1,0:T(8,128)}', space=vmem, size = 0x2000, scoped, tag = 'scratch operand']
  #allocation4 [shape = 'f32[16,32]{1,0:T(8,128)}', space=vmem, size = 0x2000, scoped, tag = 'scratch operand']
  #allocation5 [shape = 'f32[1,1]{1,0:T(1,128)S(1)}', space=vmem, size = 0x200, scoped, tag = 'scoped memory for behavioral_pattern_lstm_pallas.1']
  %s0 = inlined_call_operand.vmem [shape: f32[16,16], index: 0, kind: input, shape index: {}]
  %s1 = inlined_call_operand.vmem [shape: f32[16,128], index: 1, kind: input, shape index: {}]
  %s2 = inlined_call_operand.vmem [shape: f32[32,128], index: 2, kind: input, shape index: {}]
  %s3 = inlined_call_operand.vmem [shape: f32[1,128], index: 3, kind: input, shape index: {}]
  %s4 = inlined_call_operand.vmem [shape: f32[32,128], index: 4, kind: input, shape index: {}]
  %s5 = inlined_call_operand.vmem [shape: f32[32,128], index: 5, kind: input, shape index: {}]
  %s6 = inlined_call_operand.hbm [shape: f32[1,128], index: 6, kind: input, shape index: {}]
  %s7 = inlined_call_operand.hbm [shape: f32[32,32], index: 7, kind: input, shape index: {}]
  %s8 = inlined_call_operand.hbm [shape: f32[1,32], index: 8, kind: input, shape index: {}]
  %s9 = inlined_call_operand.hbm [shape: f32[1,32], index: 9, kind: input, shape index: {}]
  %s10 = inlined_call_operand.<no memory space> [shape: f32[1,1], index: 10, kind: input, shape index: {}]
  %s11 = inlined_call_operand.vmem [shape: f32[32,16], index: 11, kind: input, shape index: {}]
  %s12 = inlined_call_operand.hbm [shape: f32[1,16], index: 12, kind: input, shape index: {}]
  %s13 = inlined_call_operand.hbm [shape: f32[16,10], index: 13, kind: input, shape index: {}]
  %s14 = inlined_call_operand.hbm [shape: f32[1,10], index: 14, kind: input, shape index: {}]
  %s15 = inlined_call_operand.hbm [shape: f32[2,10], index: 15, kind: output, shape index: {0}]
  %s16 = inlined_call_operand.hbm [shape: f32[2,8], index: 16, kind: output, shape index: {1}]
  %17 = xla_tuple %s15, %s16
  %s18 = sld [smem:[#allocation0]]
  $region120: #{behavioral_pattern_lstm_pallas.1} parent=0
    _
  %s20 = ssub.s32 1, %s18
  %s21 = scalar_select 0, %s20, %s18
  %v22 = vstv %s10
  %23 = vst [vmem:[#allocation5] sm:$0x1] %v22
  $region1: #{behavioral_pattern_lstm_pallas.1} parent=0
    #allocation6 [shape = 'u8[512]{0}', space=vmem, size = 0x400, scoped, tag = 'input window, operand 6, single buffered']
    #allocation7 [shape = 's32[1]{0}', space=sflag, size = 0x4, scoped, tag = 'scoped memory for behavioral_pattern_lstm_pallas.1']
    #allocation8 [shape = 's32[1]{0}', space=sflag, size = 0x4, scoped, tag = 'scoped memory for behavioral_pattern_lstm_pallas.1']
    #allocation9 [shape = 'u8[16384]{0}', space=vmem, size = 0x4000, scoped, tag = 'input window, operand 7, single buffered']
    #allocation10 [shape = 's32[1]{0}', space=sflag, size = 0x4, scoped, tag = 'scoped memory for behavioral_pattern_lstm_pallas.1']
    #allocation11 [shape = 'u8[512]{0}', space=vmem, size = 0x400, scoped, tag = 'input window, operand 8, single buffered']
    #allocation12 [shape = 'u8[512]{0}', space=vmem, size = 0x400, scoped, tag = 'input window, operand 9, single buffered']
    #allocation13 [shape = 's32[1]{0}', space=sflag, size = 0x4, scoped, tag = 'scoped memory for behavioral_pattern_lstm_pallas.1']
    #allocation14 [shape = 'u8[512]{0}', space=vmem, size = 0x400, scoped, tag = 'input window, operand 12, single buffered']
    #allocation15 [shape = 'u8[8192]{0}', space=vmem, size = 0x2000, scoped, tag = 'input window, operand 13, single buffered']
    #allocation16 [shape = 's32[1]{0}', space=sflag, size = 0x4, scoped, tag = 'scoped memory for behavioral_pattern_lstm_pallas.1']
    #allocation17 [shape = 'u8[512]{0}', space=vmem, size = 0x400, scoped, tag = 'input window, operand 14, single buffered']
    #allocation18 [shape = 'u8[1024]{0}', space=vmem, size = 0x400, scoped, tag = 'output window, operand 0, single buffered']
    #allocation19 [shape = 'u8[1024]{0}', space=vmem, size = 0x400, scoped, tag = 'output window, operand 1, single buffered']
    #allocation20 [shape = 's32[1]{0}', space=sflag, size = 0x4, scoped, tag = 'scoped memory for behavioral_pattern_lstm_pallas.1']
    %24 = vsyncpa [#allocation7], 0
    %25 = vsyncpa [#allocation10], 0
    %26 = vsyncpa [#allocation13], 0
    %27 = vsyncpa [#allocation16], 0
    %28 = vsyncpa [#allocation8], 0
    %29 = vsyncpa [#allocation20], 0
    // Predicated region
    $region2: #{behavioral_pattern_lstm_pallas.1} parent=1 // pred_check
      _
    $region3: #{behavioral_pattern_lstm_pallas.1} parent=1 // pred_check_branch
      %31 = sbr.rel (0) target = $region5
    $region4: #{behavioral_pattern_lstm_pallas.1} parent=1 // pred_region
      _
    $region5: #{behavioral_pattern_lstm_pallas.1} parent=1 // pred_fallthru
      _
    // Predicated region
    $region6: #{behavioral_pattern_lstm_pallas.1} parent=1 // pred_check
      _
    $region7: #{behavioral_pattern_lstm_pallas.1} parent=1 // pred_check_branch
      %33 = sbr.rel (0) target = $region9
    $region8: #{behavioral_pattern_lstm_pallas.1} parent=1 // pred_region
      _
    $region9: #{behavioral_pattern_lstm_pallas.1} parent=1 // pred_fallthru
      _
    // Predicated region
    $region10: #{behavioral_pattern_lstm_pallas.1} parent=1 // pred_check
      _
    $region11: #{behavioral_pattern_lstm_pallas.1} parent=1 // pred_check_branch
      %35 = sbr.rel (0) target = $region13
    $region12: #{behavioral_pattern_lstm_pallas.1} parent=1 // pred_region
      _
    $region13: #{behavioral_pattern_lstm_pallas.1} parent=1 // pred_fallthru
      _
    // Predicated region
    $region14: #{behavioral_pattern_lstm_pallas.1} parent=1 // pred_check
      _
    $region15: #{behavioral_pattern_lstm_pallas.1} parent=1 // pred_check_branch
      %37 = sbr.rel (0) target = $region17
    $region16: #{behavioral_pattern_lstm_pallas.1} parent=1 // pred_region
      _
    $region17: #{behavioral_pattern_lstm_pallas.1} parent=1 // pred_fallthru
      _
    // Predicated region
    $region18: #{behavioral_pattern_lstm_pallas.1} parent=1 // pred_check
      _
    $region19: #{behavioral_pattern_lstm_pallas.1} parent=1 // pred_check_branch
      %39 = sbr.rel (0) target = $region21
    $region20: #{behavioral_pattern_lstm_pallas.1} parent=1 // pred_region
      _
    $region21: #{behavioral_pattern_lstm_pallas.1} parent=1 // pred_fallthru
      _
    // Predicated region
    $region22: #{behavioral_pattern_lstm_pallas.1} parent=1 // pred_check
      _
    $region23: #{behavioral_pattern_lstm_pallas.1} parent=1 // pred_check_branch
      %41 = sbr.rel (0) target = $region25
    $region24: #{behavioral_pattern_lstm_pallas.1} parent=1 // pred_region
      _
    $region25: #{behavioral_pattern_lstm_pallas.1} parent=1 // pred_fallthru
      _
    // Predicated region
    $region26: #{behavioral_pattern_lstm_pallas.1} parent=1 // pred_check
      _
    $region27: #{behavioral_pattern_lstm_pallas.1} parent=1 // pred_check_branch
      %43 = sbr.rel (0) target = $region29
    $region28: #{behavioral_pattern_lstm_pallas.1} parent=1 // pred_region
      %s45 = ssub.s32 16, 16
      %46 = vsyncadd [#allocation7], %s45
      %s48 = sshll.u32 [#allocation6], 4
      %s49 = int_to_ptr.vmem [resolvable:$true] %s48
      %51 = dma.hbm_to_vmem [thread:$0]  %s6, 16, %s49, [#allocation7]
    $region29: #{behavioral_pattern_lstm_pallas.1} parent=1 // pred_fallthru
      _
    // Predicated region
    $region30: #{behavioral_pattern_lstm_pallas.1} parent=1 // pred_check
      _
    $region31: #{behavioral_pattern_lstm_pallas.1} parent=1 // pred_check_branch
      %53 = sbr.rel (0) target = $region33
    $region32: #{behavioral_pattern_lstm_pallas.1} parent=1 // pred_region
      %s55 = ssub.s32 512, 512
      %56 = vsyncadd [#allocation10], %s55
      %s57 = sshll.u32 [#allocation9], 4
      %s58 = int_to_ptr.vmem [resolvable:$true] %s57
      %63 = dma.hbm_to_vmem [thread:$0]  %s7, 512, %s58, [#allocation10], 128, 128, 8
    $region33: #{behavioral_pattern_lstm_pallas.1} parent=1 // pred_fallthru
      _
    // Predicated region
    $region34: #{behavioral_pattern_lstm_pallas.1} parent=1 // pred_check
      _
    $region35: #{behavioral_pattern_lstm_pallas.1} parent=1 // pred_check_branch
      %65 = sbr.rel (0) target = $region37
    $region36: #{behavioral_pattern_lstm_pallas.1} parent=1 // pred_region
      %s67 = ssub.s32 16, 16
      %68 = vsyncadd [#allocation10], %s67
      %s70 = sshll.u32 [#allocation11], 4
      %s71 = int_to_ptr.vmem [resolvable:$true] %s70
      %73 = dma.hbm_to_vmem [thread:$0]  %s8, 16, %s71, [#allocation10]
    $region37: #{behavioral_pattern_lstm_pallas.1} parent=1 // pred_fallthru
      _
    // Predicated region
    $region38: #{behavioral_pattern_lstm_pallas.1} parent=1 // pred_check
      _
    $region39: #{behavioral_pattern_lstm_pallas.1} parent=1 // pred_check_branch
      %75 = sbr.rel (0) target = $region41
    $region40: #{behavioral_pattern_lstm_pallas.1} parent=1 // pred_region
      %s77 = ssub.s32 16, 16
      %78 = vsyncadd [#allocation13], %s77
      %s80 = sshll.u32 [#allocation12], 4
      %s81 = int_to_ptr.vmem [resolvable:$true] %s80
      %83 = dma.hbm_to_vmem [thread:$0]  %s9, 16, %s81, [#allocation13]
    $region41: #{behavioral_pattern_lstm_pallas.1} parent=1 // pred_fallthru
      _
    // Predicated region
    $region42: #{behavioral_pattern_lstm_pallas.1} parent=1 // pred_check
      _
    $region43: #{behavioral_pattern_lstm_pallas.1} parent=1 // pred_check_branch
      %85 = sbr.rel (0) target = $region45
    $region44: #{behavioral_pattern_lstm_pallas.1} parent=1 // pred_region
      _
    $region45: #{behavioral_pattern_lstm_pallas.1} parent=1 // pred_fallthru
      _
    // Predicated region
    $region46: #{behavioral_pattern_lstm_pallas.1} parent=1 // pred_check
      _
    $region47: #{behavioral_pattern_lstm_pallas.1} parent=1 // pred_check_branch
      %87 = sbr.rel (0) target = $region49
    $region48: #{behavioral_pattern_lstm_pallas.1} parent=1 // pred_region
      _
    $region49: #{behavioral_pattern_lstm_pallas.1} parent=1 // pred_fallthru
      _
    // Predicated region
    $region50: #{behavioral_pattern_lstm_pallas.1} parent=1 // pred_check
      _
    $region51: #{behavioral_pattern_lstm_pallas.1} parent=1 // pred_check_branch
      %89 = sbr.rel (0) target = $region53
    $region52: #{behavioral_pattern_lstm_pallas.1} parent=1 // pred_region
      %s91 = ssub.s32 16, 16
      %92 = vsyncadd [#allocation13], %s91
      %s94 = sshll.u32 [#allocation14], 4
      %s95 = int_to_ptr.vmem [resolvable:$true] %s94
      %97 = dma.hbm_to_vmem [thread:$0]  %s12, 16, %s95, [#allocation13]
    $region53: #{behavioral_pattern_lstm_pallas.1} parent=1 // pred_fallthru
      _
    // Predicated region
    $region54: #{behavioral_pattern_lstm_pallas.1} parent=1 // pred_check
      _
    $region55: #{behavioral_pattern_lstm_pallas.1} parent=1 // pred_check_branch
      %99 = sbr.rel (0) target = $region57
    $region56: #{behavioral_pattern_lstm_pallas.1} parent=1 // pred_region
      %s101 = ssub.s32 256, 256
      %102 = vsyncadd [#allocation16], %s101
      %s103 = sshll.u32 [#allocation15], 4
      %s104 = int_to_ptr.vmem [resolvable:$true] %s103
      %109 = dma.hbm_to_vmem [thread:$0]  %s13, 256, %s104, [#allocation16], 128, 128, 8
    $region57: #{behavioral_pattern_lstm_pallas.1} parent=1 // pred_fallthru
      _
    // Predicated region
    $region58: #{behavioral_pattern_lstm_pallas.1} parent=1 // pred_check
      _
    $region59: #{behavioral_pattern_lstm_pallas.1} parent=1 // pred_check_branch
      %111 = sbr.rel (0) target = $region61
    $region60: #{behavioral_pattern_lstm_pallas.1} parent=1 // pred_region
      %s113 = ssub.s32 16, 16
      %114 = vsyncadd [#allocation16], %s113
      %s116 = sshll.u32 [#allocation17], 4
      %s117 = int_to_ptr.vmem [resolvable:$true] %s116
      %119 = dma.hbm_to_vmem [thread:$0]  %s14, 16, %s117, [#allocation16]
    $region61: #{behavioral_pattern_lstm_pallas.1} parent=1 // pred_fallthru
      _
    // Predicated region
    $region62: #{behavioral_pattern_lstm_pallas.1} parent=1 // pred_check
      _
    $region63: #{behavioral_pattern_lstm_pallas.1} parent=1 // pred_check_branch
      %121 = sbr.rel (0) target = $region65
    $region64: #{behavioral_pattern_lstm_pallas.1} parent=1 // pred_region
      %122 = dma.done [#allocation7], 16
    $region65: #{behavioral_pattern_lstm_pallas.1} parent=1 // pred_fallthru
      _
    // Predicated region
    $region66: #{behavioral_pattern_lstm_pallas.1} parent=1 // pred_check
      _
    $region67: #{behavioral_pattern_lstm_pallas.1} parent=1 // pred_check_branch
      %124 = sbr.rel (0) target = $region69
    $region68: #{behavioral_pattern_lstm_pallas.1} parent=1 // pred_region
      %125 = dma.done [#allocation10], 512
    $region69: #{behavioral_pattern_lstm_pallas.1} parent=1 // pred_fallthru
      _
    // Predicated region
    $region70: #{behavioral_pattern_lstm_pallas.1} parent=1 // pred_check
      _
    $region71: #{behavioral_pattern_lstm_pallas.1} parent=1 // pred_check_branch
      %127 = sbr.rel (0) target = $region73
    $region72: #{behavioral_pattern_lstm_pallas.1} parent=1 // pred_region
      %128 = dma.done [#allocation10], 16
    $region73: #{behavioral_pattern_lstm_pallas.1} parent=1 // pred_fallthru
      _
    // Predicated region
    $region74: #{behavioral_pattern_lstm_pallas.1} parent=1 // pred_check
      _
    $region75: #{behavioral_pattern_lstm_pallas.1} parent=1 // pred_check_branch
      %130 = sbr.rel (0) target = $region77
    $region76: #{behavioral_pattern_lstm_pallas.1} parent=1 // pred_region
      %131 = dma.done [#allocation13], 16
    $region77: #{behavioral_pattern_lstm_pallas.1} parent=1 // pred_fallthru
      _
    // Predicated region
    $region78: #{behavioral_pattern_lstm_pallas.1} parent=1 // pred_check
      _
    $region79: #{behavioral_pattern_lstm_pallas.1} parent=1 // pred_check_branch
      %133 = sbr.rel (0) target = $region81
    $region80: #{behavioral_pattern_lstm_pallas.1} parent=1 // pred_region
      %134 = dma.done [#allocation13], 16
    $region81: #{behavioral_pattern_lstm_pallas.1} parent=1 // pred_fallthru
      _
    // Predicated region
    $region82: #{behavioral_pattern_lstm_pallas.1} parent=1 // pred_check
      _
    $region83: #{behavioral_pattern_lstm_pallas.1} parent=1 // pred_check_branch
      %136 = sbr.rel (0) target = $region85
    $region84: #{behavioral_pattern_lstm_pallas.1} parent=1 // pred_region
      %137 = dma.done [#allocation16], 256
    $region85: #{behavioral_pattern_lstm_pallas.1} parent=1 // pred_fallthru
      _
    // Predicated region
    $region86: #{behavioral_pattern_lstm_pallas.1} parent=1 // pred_check
      _
    $region87: #{behavioral_pattern_lstm_pallas.1} parent=1 // pred_check_branch
      %139 = sbr.rel (0) target = $region89
    $region88: #{behavioral_pattern_lstm_pallas.1} parent=1 // pred_region
      %140 = dma.done [#allocation16], 16
    $region89: #{behavioral_pattern_lstm_pallas.1} parent=1 // pred_fallthru
      _
    %v141 = vld [vmem:[%s2] sm:$0xff]
    %v142 = vld [vmem:[%s2 + $0x8] sm:$0xff]
    %v143 = vld [vmem:[%s2 + $0x10] sm:$0xff]
    %v144 = vld [vmem:[%s2 + $0x18] sm:$0xff]
    %v145 = vld [vmem:[%s5] sm:$0xff]
    %v146 = vld [vmem:[%s5 + $0x8] sm:$0xff]
    %v147 = vld [vmem:[%s5 + $0x10] sm:$0xff]
    %v148 = vld [vmem:[%s5 + $0x18] sm:$0xff]
    %v149 = vld [vmem:[%s0] sm:$0xff]
    %v150 = vld [vmem:[%s0 + $0x8] sm:$0xff]
    %v151 = vld [vmem:[%s1] sm:$0xff]
    %v152 = vld [vmem:[%s1 + $0x8] sm:$0xff]
    %v153 = vld [vmem:[%s3] sm:$0x1]
    %v155 = vlaneseq
    %v156 = vshrl.u32 %v155, 7
    %v157 = vsub.s32 0, %v156
    %v158 = vrot.slane %v153, %v157
    %vm160 = vcmask 130048
    %v162 = vsel %vm160, %v149, 0
    %v165 = vsel %vm160, %v150, 0
    %167 = vmatprep.subr.mxu0 0.0
    %168 = vmatpush1.msra.mxu0 %v151
    %169 = vmatprep.subr.mxu0 0.0
    %170 = vmatpush1.msra.mxu0 %v152
    %171 = vmatprep.subr.mxu0 0.0
    %172 = vmatpush1.msra.mxu0 0.0
    %173 = vmatprep.subr.mxu0 0.0
    %174 = vmatpush1.msra.mxu0 0.0
    %175 = vmatprep.subr.mxu0 0.0
    %176 = vmatpush1.msra.mxu0 0.0
    %177 = vmatprep.subr.mxu0 0.0
    %178 = vmatpush1.msra.mxu0 0.0
    %179 = vmatprep.subr.mxu0 0.0
    %180 = vmatpush1.msra.mxu0 0.0
    %181 = vmatprep.subr.mxu0 0.0
    %182 = vmatpush1.msra.mxu0 0.0
    %183 = vmatprep.subr.mxu0 0.0
    %184 = vmatpush1.msra.mxu0 0.0
    %185 = vmatprep.subr.mxu0 0.0
    %186 = vmatpush1.msra.mxu0 0.0
    %187 = vmatprep.subr.mxu0 0.0
    %188 = vmatpush1.msra.mxu0 0.0
    %189 = vmatprep.subr.mxu0 0.0
    %190 = vmatpush1.msra.mxu0 0.0
    %191 = vmatprep.subr.mxu0 0.0
    %192 = vmatpush1.msra.mxu0 0.0
    %193 = vmatprep.subr.mxu0 0.0
    %194 = vmatpush1.msra.mxu0 0.0
    %195 = vmatprep.subr.mxu0 0.0
    %196 = vmatpush1.msra.mxu0 0.0
    %197 = vmatprep.subr.mxu0 0.0
    %198 = vmatpush1.msra.mxu0 0.0
    %199 = vmatprep.subr.mxu0 0.0
    %200 = vmatpush1.msra.mxu0 0.0
    %201 = vmatprep.subr.mxu0 0.0
    %202 = vmatpush1.msra.mxu0 0.0
    %203 = vmatprep.subr.mxu0 0.0
    %204 = vmatpush1.msra.mxu0 0.0
    %205 = vmatprep.subr.mxu0 0.0
    %206 = vmatpush1.msra.mxu0 0.0
    %207 = vmatprep.subr.mxu0 0.0
    %208 = vmatpush1.msra.mxu0 0.0
    %209 = vmatprep.subr.mxu0 0.0
    %210 = vmatpush1.msra.mxu0 0.0
    %211 = vmatprep.subr.mxu0 0.0
    %212 = vmatpush1.msra.mxu0 0.0
    %213 = vmatprep.subr.mxu0 0.0
    %214 = vmatpush1.msra.mxu0 0.0
    %215 = vmatprep.subr.mxu0 0.0
    %216 = vmatpush1.msra.mxu0 0.0
    %217 = vmatprep.subr.mxu0 0.0
    %218 = vmatpush1.msra.mxu0 0.0
    %219 = vmatprep.subr.mxu0 0.0
    %220 = vmatpush1.msra.mxu0 0.0
    %221 = vmatprep.subr.mxu0 0.0
    %222 = vmatpush1.msra.mxu0 0.0
    %223 = vmatprep.subr.mxu0 0.0
    %224 = vmatpush1.msra.mxu0 0.0
    %225 = vmatprep.subr.mxu0 0.0
    %226 = vmatpush1.msra.mxu0 0.0
    %227 = vmatprep.subr.mxu0 0.0
    %228 = vmatpush1.msra.mxu0 0.0
    %229 = vmatprep.subr.mxu0 0.0
    %230 = vmatpush1.msra.mxu0 0.0
    %231 = vmatprep.mubr.f32.mxu0 0.0
    %232 = vmatmul.mubr.f32.gmra.mrb[0].mxu0 %v162
    %v233 = vpop.f32.mrb[0].mxu0
    %v234 = vadd.f32 %v158, %v233
    %v235 = vpop.f32.mrb[0].mxu0
    %236 = vmatprep.mubr.f32.mxu0 0.0
    %237 = vmatmul.mubr.f32.gmra.mrb[0].mxu0 %v165
    %v238 = vpop.f32.mrb[0].mxu0
    %v239 = vadd.f32 %v158, %v238
    %v240 = vpop.f32.mrb[0].mxu0
    %241 = vdwg.mxu0
    %242 = vst [vmem:[#allocation2] sm:$0xff] %v234
    %243 = vst [vmem:[#allocation2 + $0x8] sm:$0xff] %v239
    loop: start=0, step=1, limit=8
    $region90: #{behavioral_pattern_lstm_pallas.1} parent=1 // loop_pre_header
      _
    $region91: #{behavioral_pattern_lstm_pallas.1} parent=1 // loop_header
      %s245 = sphi 0, %s249
      %p246 = scmp.ge.s32.totalorder %s245, 8
      %v250 = vphi 0.0, %v355
      %v251 = vphi 0.0, %v349
    $region92: #{behavioral_pattern_lstm_pallas.1} parent=1 // loop_header_branch
      %248 = sbr.rel (%p246) target = $region96
    $region93: #{behavioral_pattern_lstm_pallas.1} parent=1 // loop_body
      %s252 = smul.u32 %s245, 2
      %s253 = scalar_lea.vmem [#allocation2], %s252
      %v254 = vld [vmem:[%s253] sm:$0x3]
      %256 = vrot.lane.b32.xlu0 %v250, 32
      %v257 = vpop.permute.xlu0 %256
      %vm258 = vcmask 261120
      %v259 = vsel %vm258, %v257, 0
      %261 = vmatprep.subr.mxu0 0.0
      %262 = vmatpush1.msra.mxu0 %v141
      %263 = vmatprep.subr.mxu0 0.0
      %264 = vmatpush1.msra.mxu0 %v142
      %265 = vmatprep.subr.mxu0 0.0
      %266 = vmatpush1.msra.mxu0 %v143
      %267 = vmatprep.subr.mxu0 0.0
      %268 = vmatpush1.msra.mxu0 %v144
      %269 = vmatprep.subr.mxu0 0.0
      %270 = vmatpush1.msra.mxu0 0.0
      %271 = vmatprep.subr.mxu0 0.0
      %272 = vmatpush1.msra.mxu0 0.0
      %273 = vmatprep.subr.mxu0 0.0
      %274 = vmatpush1.msra.mxu0 0.0
      %275 = vmatprep.subr.mxu0 0.0
      %276 = vmatpush1.msra.mxu0 0.0
      %277 = vmatprep.subr.mxu0 0.0
      %278 = vmatpush1.msra.mxu0 0.0
      %279 = vmatprep.subr.mxu0 0.0
      %280 = vmatpush1.msra.mxu0 0.0
      %281 = vmatprep.subr.mxu0 0.0
      %282 = vmatpush1.msra.mxu0 0.0
      %283 = vmatprep.subr.mxu0 0.0
      %284 = vmatpush1.msra.mxu0 0.0
      %285 = vmatprep.subr.mxu0 0.0
      %286 = vmatpush1.msra.mxu0 0.0
      %287 = vmatprep.subr.mxu0 0.0
      %288 = vmatpush1.msra.mxu0 0.0
      %289 = vmatprep.subr.mxu0 0.0
      %290 = vmatpush1.msra.mxu0 0.0
      %291 = vmatprep.subr.mxu0 0.0
      %292 = vmatpush1.msra.mxu0 0.0
      %293 = vmatprep.subr.mxu0 0.0
      %294 = vmatpush1.msra.mxu0 0.0
      %295 = vmatprep.subr.mxu0 0.0
      %296 = vmatpush1.msra.mxu0 0.0
      %297 = vmatprep.subr.mxu0 0.0
      %298 = vmatpush1.msra.mxu0 0.0
      %299 = vmatprep.subr.mxu0 0.0
      %300 = vmatpush1.msra.mxu0 0.0
      %301 = vmatprep.subr.mxu0 0.0
      %302 = vmatpush1.msra.mxu0 0.0
      %303 = vmatprep.subr.mxu0 0.0
      %304 = vmatpush1.msra.mxu0 0.0
      %305 = vmatprep.subr.mxu0 0.0
      %306 = vmatpush1.msra.mxu0 0.0
      %307 = vmatprep.subr.mxu0 0.0
      %308 = vmatpush1.msra.mxu0 0.0
      %309 = vmatprep.subr.mxu0 0.0
      %310 = vmatpush1.msra.mxu0 0.0
      %311 = vmatprep.subr.mxu0 0.0
      %312 = vmatpush1.msra.mxu0 0.0
      %313 = vmatprep.subr.mxu0 0.0
      %314 = vmatpush1.msra.mxu0 0.0
      %315 = vmatprep.subr.mxu0 0.0
      %316 = vmatpush1.msra.mxu0 0.0
      %317 = vmatprep.subr.mxu0 0.0
      %318 = vmatpush1.msra.mxu0 0.0
      %319 = vmatprep.subr.mxu0 0.0
      %320 = vmatpush1.msra.mxu0 0.0
      %321 = vmatprep.subr.mxu0 0.0
      %322 = vmatpush1.msra.mxu0 0.0
      %323 = vmatprep.subr.mxu0 0.0
      %324 = vmatpush1.msra.mxu0 0.0
      %325 = vmatprep.mubr.f32.mxu0 0.0
      %326 = vmatmul.mubr.f32.gmra.mrb[0].mxu0 %v259
      %v327 = vpop.f32.mrb[0].mxu0
      %v328 = vadd.f32 0.0, %v327
      %v329 = vpop.f32.mrb[0].mxu0
      %330 = vdwg.mxu0
      %v331 = vadd.f32 %v254, %v328
      %v332 = vxor.u32 %v331, 2147483648
      %v333 = vmul.f32 %v332, 1.442695
      %v334 = vpow.pop %v333
      %v335 = vadd.f32 %v334, 1.0
      %v336 = vrcp.pop %v335
      %v337 = vmul.f32 1.0, %v336
      %v338 = vtanh.pop %v331
      %v339 = vmul.f32 %v337, %v251
      %341 = vrot.lane.b32.xlu0 %v338, 64
      %v342 = vpop.permute.xlu0 %341
      %v344 = vmul.f32 %v337, %v342
      %346 = vrot.lane.b32.xlu0 %v344, 32
      %v347 = vpop.permute.xlu0 %346
      %v349 = vadd.f32 %v339, %v347
      %v350 = vtanh.pop %v349
      %352 = vrot.lane.b32.xlu0 %v350, 64
      %v353 = vpop.permute.xlu0 %352
      %v355 = vmul.f32 %v337, %v353
      %357 = vrot.lane.b32.xlu0 %v355, 32
      %v358 = vpop.permute.xlu0 %357
      %s360 = scalar_lea.vmem [#allocation3], %s252
      %vm361 = vcmask 254976
      %362 = vst.msk [vmem:[%s360] sm:$0x3] %vm361, %v358
    $region94: #{behavioral_pattern_lstm_pallas.1} parent=1 // loop_footer
      %s249 = sadd.s32 1, %s245
    $region95: #{behavioral_pattern_lstm_pallas.1} parent=1 // loop_footer_branch
      %244 = sbr.rel target = $region91
    $region96: #{behavioral_pattern_lstm_pallas.1} parent=1 // loop_exit
      _
    %v363 = vld [vmem:[#allocation3] sm:$0xff]
    %v364 = vld [vmem:[#allocation3 + $0x8] sm:$0xff]
    %v365 = vld [vmem:[%s4] sm:$0xff]
    %v366 = vld [vmem:[%s4 + $0x8] sm:$0xff]
    %v367 = vld [vmem:[%s4 + $0x10] sm:$0xff]
    %v368 = vld [vmem:[%s4 + $0x18] sm:$0xff]
    %v369 = vld [vmem:[#allocation6] sm:$0x1]
    %v371 = vlaneseq
    %v372 = vshrl.u32 %v371, 7
    %v373 = vsub.s32 0, %v372
    %v374 = vrot.slane %v369, %v373
    %vm376 = vcmask 261120
    %v378 = vsel %vm376, %v363, 0
    %v381 = vsel %vm376, %v364, 0
    %383 = vmatprep.subr.mxu0 0.0
    %384 = vmatpush1.msra.mxu0 %v365
    %385 = vmatprep.subr.mxu0 0.0
    %386 = vmatpush1.msra.mxu0 %v366
    %387 = vmatprep.subr.mxu0 0.0
    %388 = vmatpush1.msra.mxu0 %v367
    %389 = vmatprep.subr.mxu0 0.0
    %390 = vmatpush1.msra.mxu0 %v368
    %391 = vmatprep.subr.mxu0 0.0
    %392 = vmatpush1.msra.mxu0 0.0
    %393 = vmatprep.subr.mxu0 0.0
    %394 = vmatpush1.msra.mxu0 0.0
    %395 = vmatprep.subr.mxu0 0.0
    %396 = vmatpush1.msra.mxu0 0.0
    %397 = vmatprep.subr.mxu0 0.0
    %398 = vmatpush1.msra.mxu0 0.0
    %399 = vmatprep.subr.mxu0 0.0
    %400 = vmatpush1.msra.mxu0 0.0
    %401 = vmatprep.subr.mxu0 0.0
    %402 = vmatpush1.msra.mxu0 0.0
    %403 = vmatprep.subr.mxu0 0.0
    %404 = vmatpush1.msra.mxu0 0.0
    %405 = vmatprep.subr.mxu0 0.0
    %406 = vmatpush1.msra.mxu0 0.0
    %407 = vmatprep.subr.mxu0 0.0
    %408 = vmatpush1.msra.mxu0 0.0
    %409 = vmatprep.subr.mxu0 0.0
    %410 = vmatpush1.msra.mxu0 0.0
    %411 = vmatprep.subr.mxu0 0.0
    %412 = vmatpush1.msra.mxu0 0.0
    %413 = vmatprep.subr.mxu0 0.0
    %414 = vmatpush1.msra.mxu0 0.0
    %415 = vmatprep.subr.mxu0 0.0
    %416 = vmatpush1.msra.mxu0 0.0
    %417 = vmatprep.subr.mxu0 0.0
    %418 = vmatpush1.msra.mxu0 0.0
    %419 = vmatprep.subr.mxu0 0.0
    %420 = vmatpush1.msra.mxu0 0.0
    %421 = vmatprep.subr.mxu0 0.0
    %422 = vmatpush1.msra.mxu0 0.0
    %423 = vmatprep.subr.mxu0 0.0
    %424 = vmatpush1.msra.mxu0 0.0
    %425 = vmatprep.subr.mxu0 0.0
    %426 = vmatpush1.msra.mxu0 0.0
    %427 = vmatprep.subr.mxu0 0.0
    %428 = vmatpush1.msra.mxu0 0.0
    %429 = vmatprep.subr.mxu0 0.0
    %430 = vmatpush1.msra.mxu0 0.0
    %431 = vmatprep.subr.mxu0 0.0
    %432 = vmatpush1.msra.mxu0 0.0
    %433 = vmatprep.subr.mxu0 0.0
    %434 = vmatpush1.msra.mxu0 0.0
    %435 = vmatprep.subr.mxu0 0.0
    %436 = vmatpush1.msra.mxu0 0.0
    %437 = vmatprep.subr.mxu0 0.0
    %438 = vmatpush1.msra.mxu0 0.0
    %439 = vmatprep.subr.mxu0 0.0
    %440 = vmatpush1.msra.mxu0 0.0
    %441 = vmatprep.subr.mxu0 0.0
    %442 = vmatpush1.msra.mxu0 0.0
    %443 = vmatprep.subr.mxu0 0.0
    %444 = vmatpush1.msra.mxu0 0.0
    %445 = vmatprep.subr.mxu0 0.0
    %446 = vmatpush1.msra.mxu0 0.0
    %447 = vmatprep.mubr.f32.mxu0 0.0
    %448 = vmatmul.mubr.f32.gmra.mrb[0].mxu0 %v378
    %v449 = vpop.f32.mrb[0].mxu0
    %v450 = vadd.f32 %v374, %v449
    %v451 = vpop.f32.mrb[0].mxu0
    %452 = vmatprep.mubr.f32.mxu0 0.0
    %453 = vmatmul.mubr.f32.gmra.mrb[0].mxu0 %v381
    %v454 = vpop.f32.mrb[0].mxu0
    %v455 = vadd.f32 %v374, %v454
    %v456 = vpop.f32.mrb[0].mxu0
    %457 = vdwg.mxu0
    %458 = vst [vmem:[#allocation2] sm:$0xff] %v450
    %459 = vst [vmem:[#allocation2 + $0x8] sm:$0xff] %v455
    loop: start=0, step=1, limit=8
    $region97: #{behavioral_pattern_lstm_pallas.1} parent=1 // loop_pre_header
      _
    $region98: #{behavioral_pattern_lstm_pallas.1} parent=1 // loop_header
      %s461 = sphi 0, %s465
      %p462 = scmp.ge.s32.totalorder %s461, 8
      %v466 = vphi 0.0, %v570
      %v467 = vphi 0.0, %v564
    $region99: #{behavioral_pattern_lstm_pallas.1} parent=1 // loop_header_branch
      %464 = sbr.rel (%p462) target = $region103
    $region100: #{behavioral_pattern_lstm_pallas.1} parent=1 // loop_body
      %s468 = smul.u32 %s461, 2
      %s469 = scalar_lea.vmem [#allocation2], %s468
      %v470 = vld [vmem:[%s469] sm:$0x3]
      %472 = vrot.lane.b32.xlu0 %v466, 32
      %v473 = vpop.permute.xlu0 %472
      %v474 = vsel %vm376, %v473, 0
      %476 = vmatprep.subr.mxu0 0.0
      %477 = vmatpush1.msra.mxu0 %v145
      %478 = vmatprep.subr.mxu0 0.0
      %479 = vmatpush1.msra.mxu0 %v146
      %480 = vmatprep.subr.mxu0 0.0
      %481 = vmatpush1.msra.mxu0 %v147
      %482 = vmatprep.subr.mxu0 0.0
      %483 = vmatpush1.msra.mxu0 %v148
      %484 = vmatprep.subr.mxu0 0.0
      %485 = vmatpush1.msra.mxu0 0.0
      %486 = vmatprep.subr.mxu0 0.0
      %487 = vmatpush1.msra.mxu0 0.0
      %488 = vmatprep.subr.mxu0 0.0
      %489 = vmatpush1.msra.mxu0 0.0
      %490 = vmatprep.subr.mxu0 0.0
      %491 = vmatpush1.msra.mxu0 0.0
      %492 = vmatprep.subr.mxu0 0.0
      %493 = vmatpush1.msra.mxu0 0.0
      %494 = vmatprep.subr.mxu0 0.0
      %495 = vmatpush1.msra.mxu0 0.0
      %496 = vmatprep.subr.mxu0 0.0
      %497 = vmatpush1.msra.mxu0 0.0
      %498 = vmatprep.subr.mxu0 0.0
      %499 = vmatpush1.msra.mxu0 0.0
      %500 = vmatprep.subr.mxu0 0.0
      %501 = vmatpush1.msra.mxu0 0.0
      %502 = vmatprep.subr.mxu0 0.0
      %503 = vmatpush1.msra.mxu0 0.0
      %504 = vmatprep.subr.mxu0 0.0
      %505 = vmatpush1.msra.mxu0 0.0
      %506 = vmatprep.subr.mxu0 0.0
      %507 = vmatpush1.msra.mxu0 0.0
      %508 = vmatprep.subr.mxu0 0.0
      %509 = vmatpush1.msra.mxu0 0.0
      %510 = vmatprep.subr.mxu0 0.0
      %511 = vmatpush1.msra.mxu0 0.0
      %512 = vmatprep.subr.mxu0 0.0
      %513 = vmatpush1.msra.mxu0 0.0
      %514 = vmatprep.subr.mxu0 0.0
      %515 = vmatpush1.msra.mxu0 0.0
      %516 = vmatprep.subr.mxu0 0.0
      %517 = vmatpush1.msra.mxu0 0.0
      %518 = vmatprep.subr.mxu0 0.0
      %519 = vmatpush1.msra.mxu0 0.0
      %520 = vmatprep.subr.mxu0 0.0
      %521 = vmatpush1.msra.mxu0 0.0
      %522 = vmatprep.subr.mxu0 0.0
      %523 = vmatpush1.msra.mxu0 0.0
      %524 = vmatprep.subr.mxu0 0.0
      %525 = vmatpush1.msra.mxu0 0.0
      %526 = vmatprep.subr.mxu0 0.0
      %527 = vmatpush1.msra.mxu0 0.0
      %528 = vmatprep.subr.mxu0 0.0
      %529 = vmatpush1.msra.mxu0 0.0
      %530 = vmatprep.subr.mxu0 0.0
      %531 = vmatpush1.msra.mxu0 0.0
      %532 = vmatprep.subr.mxu0 0.0
      %533 = vmatpush1.msra.mxu0 0.0
      %534 = vmatprep.subr.mxu0 0.0
      %535 = vmatpush1.msra.mxu0 0.0
      %536 = vmatprep.subr.mxu0 0.0
      %537 = vmatpush1.msra.mxu0 0.0
      %538 = vmatprep.subr.mxu0 0.0
      %539 = vmatpush1.msra.mxu0 0.0
      %540 = vmatprep.mubr.f32.mxu0 0.0
      %541 = vmatmul.mubr.f32.gmra.mrb[0].mxu0 %v474
      %v542 = vpop.f32.mrb[0].mxu0
      %v543 = vadd.f32 0.0, %v542
      %v544 = vpop.f32.mrb[0].mxu0
      %545 = vdwg.mxu0
      %v546 = vadd.f32 %v470, %v543
      %v547 = vxor.u32 %v546, 2147483648
      %v548 = vmul.f32 %v547, 1.442695
      %v549 = vpow.pop %v548
      %v550 = vadd.f32 %v549, 1.0
      %v551 = vrcp.pop %v550
      %v552 = vmul.f32 1.0, %v551
      %v553 = vtanh.pop %v546
      %v554 = vmul.f32 %v552, %v467
      %556 = vrot.lane.b32.xlu0 %v553, 64
      %v557 = vpop.permute.xlu0 %556
      %v559 = vmul.f32 %v552, %v557
      %561 = vrot.lane.b32.xlu0 %v559, 32
      %v562 = vpop.permute.xlu0 %561
      %v564 = vadd.f32 %v554, %v562
      %v565 = vtanh.pop %v564
      %567 = vrot.lane.b32.xlu0 %v565, 64
      %v568 = vpop.permute.xlu0 %567
      %v570 = vmul.f32 %v552, %v568
      %572 = vrot.lane.b32.xlu0 %v570, 32
      %v573 = vpop.permute.xlu0 %572
      %s575 = scalar_lea.vmem [#allocation4], %s468
      %vm576 = vcmask 254976
      %577 = vst.msk [vmem:[%s575] sm:$0x3] %vm576, %v573
    $region101: #{behavioral_pattern_lstm_pallas.1} parent=1 // loop_footer
      %s465 = sadd.s32 1, %s461
    $region102: #{behavioral_pattern_lstm_pallas.1} parent=1 // loop_footer_branch
      %460 = sbr.rel target = $region98
    $region103: #{behavioral_pattern_lstm_pallas.1} parent=1 // loop_exit
      _
    %v578 = vld [vmem:[#allocation4] sm:$0xff]
    %v579 = vld [vmem:[#allocation4 + $0x8] sm:$0xff]
    %v580 = vld [vmem:[#allocation9] sm:$0xff]
    %v581 = vld [vmem:[#allocation9 + $0x8] sm:$0xff]
    %v582 = vld [vmem:[#allocation9 + $0x10] sm:$0xff]
    %v583 = vld [vmem:[#allocation9 + $0x18] sm:$0xff]
    %v584 = vld [vmem:[#allocation11] sm:$0x1]
    %v586 = vlaneseq
    %v587 = vshrl.u32 %v586, 7
    %v588 = vsub.s32 0, %v587
    %v589 = vrot.slane %v584, %v588
    %v592 = vsel %vm376, %v578, 0
    %v595 = vsel %vm376, %v579, 0
    %597 = vmatprep.subr.mxu0 0.0
    %598 = vmatpush1.msra.mxu0 %v580
    %599 = vmatprep.subr.mxu0 0.0
    %600 = vmatpush1.msra.mxu0 %v581
    %601 = vmatprep.subr.mxu0 0.0
    %602 = vmatpush1.msra.mxu0 %v582
    %603 = vmatprep.subr.mxu0 0.0
    %604 = vmatpush1.msra.mxu0 %v583
    %605 = vmatprep.subr.mxu0 0.0
    %606 = vmatpush1.msra.mxu0 0.0
    %607 = vmatprep.subr.mxu0 0.0
    %608 = vmatpush1.msra.mxu0 0.0
    %609 = vmatprep.subr.mxu0 0.0
    %610 = vmatpush1.msra.mxu0 0.0
    %611 = vmatprep.subr.mxu0 0.0
    %612 = vmatpush1.msra.mxu0 0.0
    %613 = vmatprep.subr.mxu0 0.0
    %614 = vmatpush1.msra.mxu0 0.0
    %615 = vmatprep.subr.mxu0 0.0
    %616 = vmatpush1.msra.mxu0 0.0
    %617 = vmatprep.subr.mxu0 0.0
    %618 = vmatpush1.msra.mxu0 0.0
    %619 = vmatprep.subr.mxu0 0.0
    %620 = vmatpush1.msra.mxu0 0.0
    %621 = vmatprep.subr.mxu0 0.0
    %622 = vmatpush1.msra.mxu0 0.0
    %623 = vmatprep.subr.mxu0 0.0
    %624 = vmatpush1.msra.mxu0 0.0
    %625 = vmatprep.subr.mxu0 0.0
    %626 = vmatpush1.msra.mxu0 0.0
    %627 = vmatprep.subr.mxu0 0.0
    %628 = vmatpush1.msra.mxu0 0.0
    %629 = vmatprep.subr.mxu0 0.0
    %630 = vmatpush1.msra.mxu0 0.0
    %631 = vmatprep.subr.mxu0 0.0
    %632 = vmatpush1.msra.mxu0 0.0
    %633 = vmatprep.subr.mxu0 0.0
    %634 = vmatpush1.msra.mxu0 0.0
    %635 = vmatprep.subr.mxu0 0.0
    %636 = vmatpush1.msra.mxu0 0.0
    %637 = vmatprep.subr.mxu0 0.0
    %638 = vmatpush1.msra.mxu0 0.0
    %639 = vmatprep.subr.mxu0 0.0
    %640 = vmatpush1.msra.mxu0 0.0
    %641 = vmatprep.subr.mxu0 0.0
    %642 = vmatpush1.msra.mxu0 0.0
    %643 = vmatprep.subr.mxu0 0.0
    %644 = vmatpush1.msra.mxu0 0.0
    %645 = vmatprep.subr.mxu0 0.0
    %646 = vmatpush1.msra.mxu0 0.0
    %647 = vmatprep.subr.mxu0 0.0
    %648 = vmatpush1.msra.mxu0 0.0
    %649 = vmatprep.subr.mxu0 0.0
    %650 = vmatpush1.msra.mxu0 0.0
    %651 = vmatprep.subr.mxu0 0.0
    %652 = vmatpush1.msra.mxu0 0.0
    %653 = vmatprep.subr.mxu0 0.0
    %654 = vmatpush1.msra.mxu0 0.0
    %655 = vmatprep.subr.mxu0 0.0
    %656 = vmatpush1.msra.mxu0 0.0
    %657 = vmatprep.subr.mxu0 0.0
    %658 = vmatpush1.msra.mxu0 0.0
    %659 = vmatprep.subr.mxu0 0.0
    %660 = vmatpush1.msra.mxu0 0.0
    %661 = vmatprep.mubr.f32.mxu0 0.0
    %662 = vmatmul.mubr.f32.gmra.mrb[0].mxu0 %v592
    %v663 = vpop.f32.mrb[0].mxu0
    %v664 = vadd.f32 %v589, %v663
    %v665 = vpop.f32.mrb[0].mxu0
    %666 = vmatprep.mubr.f32.mxu0 0.0
    %667 = vmatmul.mubr.f32.gmra.mrb[0].mxu0 %v595
    %v668 = vpop.f32.mrb[0].mxu0
    %v669 = vadd.f32 %v589, %v668
    %v670 = vpop.f32.mrb[0].mxu0
    %671 = vdwg.mxu0
    %v672 = vtanh.pop %v664
    %v673 = vtanh.pop %v669
    %v674 = vld [vmem:[#allocation12] sm:$0x1]
    %v676 = vlaneseq
    %v677 = vshrl.u32 %v676, 7
    %v678 = vsub.s32 0, %v677
    %v679 = vrot.slane %v674, %v678
    %v681 = vmul.f32 %v672, %v679
    %v682 = vmul.f32 %v673, %v679
    %v683 = vsel %vm376, %v681, 0.0
    %684 = vadd.xlane.f32.xlu0 %v683
    %v685 = vpop.xlane.xlu0 %684
    %v686 = vsel %vm376, %v682, 0.0
    %687 = vadd.xlane.f32.xlu0 %v686
    %v688 = vpop.xlane.xlu0 %687
    %v689 = vld [vmem:[#allocation5] sm:$0x1]
    %v691 = vlaneseq
    %v692 = vshrl.u32 %v691, 7
    %v693 = vsub.s32 0, %v692
    %v694 = vrot.slane %v689, %v693
    %v696 = vadd.f32 %v685, %v694
    %v697 = vadd.f32 %v688, %v694
    %v699 = vrot.slane %v696, 2
    %700 = vrot.lane.b32.xlu0 %v699, 1
    %v701 = vpop.permute.xlu0 %700
    %v703 = vrot.slane %v696, 4
    %704 = vrot.lane.b32.xlu0 %v703, 2
    %v705 = vpop.permute.xlu0 %704
    %v707 = vrot.slane %v696, 6
    %708 = vrot.lane.b32.xlu0 %v707, 3
    %v709 = vpop.permute.xlu0 %708
    %712 = vrot.lane.b32.xlu0 %v697, 4
    %v713 = vpop.permute.xlu0 %712
    %v715 = vrot.slane %v697, 2
    %716 = vrot.lane.b32.xlu0 %v715, 5
    %v717 = vpop.permute.xlu0 %716
    %v719 = vrot.slane %v697, 4
    %720 = vrot.lane.b32.xlu0 %v719, 6
    %v721 = vpop.permute.xlu0 %720
    %v723 = vrot.slane %v697, 6
    %724 = vrot.lane.b32.xlu0 %v723, 7
    %v725 = vpop.permute.xlu0 %724
    %vm727 = vcmask 7168
    %v728 = vsel %vm727, %v696, %v701
    %vm729 = vcmask 15360
    %v730 = vsel %vm729, %v728, %v705
    %vm731 = vcmask 23552
    %v732 = vsel %vm731, %v730, %v709
    %vm733 = vcmask 31744
    %v734 = vsel %vm733, %v732, %v713
    %vm735 = vcmask 39936
    %v736 = vsel %vm735, %v734, %v717
    %vm737 = vcmask 48128
    %v738 = vsel %vm737, %v736, %v721
    %vm739 = vcmask 56320
    %v740 = vsel %vm739, %v738, %v725
    %vm741 = vcmask 58368
    %v742 = vsel %vm741, %v740, -inf
    %743 = vmax.xlane.f32.xlu0 %v742
    %v744 = vpop.xlane.xlu0 %743
    %v745 = vsub.f32 %v740, %v744
    %v746 = vmul.f32 %v745, 1.442695
    %v747 = vpow.pop %v746
    %v748 = vsel %vm741, %v747, 0.0
    %749 = vadd.xlane.f32.xlu0 %v748
    %v750 = vpop.xlane.xlu0 %749
    %v751 = vrcp.pop %v750
    %v752 = vmul.f32 %v747, %v751
    %753 = vst.msk [vmem:[#allocation19] sm:$0x3] %vm741, %v752
    %755 = vset.pattern.permute.xlu0 0
    %756 = vperm.xlu0 %755, %v752
    %v757 = vpop.permute.xlu0 %756
    %v759 = vmul.f32 %v757, %v578
    %v760 = vadd.f32 %v759, 0.0
    %761 = vset.pattern.permute.xlu0 1
    %762 = vperm.xlu0 %761, %v752
    %v763 = vpop.permute.xlu0 %762
    %v765 = vrot.slane %v578, 2
    %v767 = vmul.f32 %v763, %v765
    %v768 = vadd.f32 %v760, %v767
    %769 = vset.pattern.permute.xlu0 2
    %770 = vperm.xlu0 %769, %v752
    %v771 = vpop.permute.xlu0 %770
    %v773 = vrot.slane %v578, 4
    %v775 = vmul.f32 %v771, %v773
    %v776 = vadd.f32 %v768, %v775
    %777 = vset.pattern.permute.xlu0 3
    %778 = vperm.xlu0 %777, %v752
    %v779 = vpop.permute.xlu0 %778
    %v781 = vrot.slane %v578, 6
    %v783 = vmul.f32 %v779, %v781
    %v784 = vadd.f32 %v776, %v783
    %785 = vset.pattern.permute.xlu0 4
    %786 = vperm.xlu0 %785, %v752
    %v787 = vpop.permute.xlu0 %786
    %v789 = vmul.f32 %v787, %v579
    %v790 = vadd.f32 %v784, %v789
    %791 = vset.pattern.permute.xlu0 5
    %792 = vperm.xlu0 %791, %v752
    %v793 = vpop.permute.xlu0 %792
    %v795 = vrot.slane %v579, 2
    %v797 = vmul.f32 %v793, %v795
    %v798 = vadd.f32 %v790, %v797
    %799 = vset.pattern.permute.xlu0 6
    %800 = vperm.xlu0 %799, %v752
    %v801 = vpop.permute.xlu0 %800
    %v803 = vrot.slane %v579, 4
    %v805 = vmul.f32 %v801, %v803
    %v806 = vadd.f32 %v798, %v805
    %807 = vset.pattern.permute.xlu0 7
    %808 = vperm.xlu0 %807, %v752
    %v809 = vpop.permute.xlu0 %808
    %v811 = vrot.slane %v579, 6
    %v813 = vmul.f32 %v809, %v811
    %v814 = vadd.f32 %v806, %v813
    %v815 = vld [vmem:[%s11] sm:$0xff]
    %v816 = vld [vmem:[%s11 + $0x8] sm:$0xff]
    %v817 = vld [vmem:[%s11 + $0x10] sm:$0xff]
    %v818 = vld [vmem:[%s11 + $0x18] sm:$0xff]
    %v819 = vld [vmem:[#allocation14] sm:$0x1]
    %v821 = vlaneseq
    %v822 = vshrl.u32 %v821, 7
    %v823 = vsub.s32 0, %v822
    %v824 = vrot.slane %v819, %v823
    %v827 = vsel %vm376, %v814, 0
    %829 = vmatprep.subr.mxu0 0.0
    %830 = vmatpush1.msra.mxu0 %v815
    %831 = vmatprep.subr.mxu0 0.0
    %832 = vmatpush1.msra.mxu0 %v816
    %833 = vmatprep.subr.mxu0 0.0
    %834 = vmatpush1.msra.mxu0 %v817
    %835 = vmatprep.subr.mxu0 0.0
    %836 = vmatpush1.msra.mxu0 %v818
    %837 = vmatprep.subr.mxu0 0.0
    %838 = vmatpush1.msra.mxu0 0.0
    %839 = vmatprep.subr.mxu0 0.0
    %840 = vmatpush1.msra.mxu0 0.0
    %841 = vmatprep.subr.mxu0 0.0
    %842 = vmatpush1.msra.mxu0 0.0
    %843 = vmatprep.subr.mxu0 0.0
    %844 = vmatpush1.msra.mxu0 0.0
    %845 = vmatprep.subr.mxu0 0.0
    %846 = vmatpush1.msra.mxu0 0.0
    %847 = vmatprep.subr.mxu0 0.0
    %848 = vmatpush1.msra.mxu0 0.0
    %849 = vmatprep.subr.mxu0 0.0
    %850 = vmatpush1.msra.mxu0 0.0
    %851 = vmatprep.subr.mxu0 0.0
    %852 = vmatpush1.msra.mxu0 0.0
    %853 = vmatprep.subr.mxu0 0.0
    %854 = vmatpush1.msra.mxu0 0.0
    %855 = vmatprep.subr.mxu0 0.0
    %856 = vmatpush1.msra.mxu0 0.0
    %857 = vmatprep.subr.mxu0 0.0
    %858 = vmatpush1.msra.mxu0 0.0
    %859 = vmatprep.subr.mxu0 0.0
    %860 = vmatpush1.msra.mxu0 0.0
    %861 = vmatprep.subr.mxu0 0.0
    %862 = vmatpush1.msra.mxu0 0.0
    %863 = vmatprep.subr.mxu0 0.0
    %864 = vmatpush1.msra.mxu0 0.0
    %865 = vmatprep.subr.mxu0 0.0
    %866 = vmatpush1.msra.mxu0 0.0
    %867 = vmatprep.subr.mxu0 0.0
    %868 = vmatpush1.msra.mxu0 0.0
    %869 = vmatprep.subr.mxu0 0.0
    %870 = vmatpush1.msra.mxu0 0.0
    %871 = vmatprep.subr.mxu0 0.0
    %872 = vmatpush1.msra.mxu0 0.0
    %873 = vmatprep.subr.mxu0 0.0
    %874 = vmatpush1.msra.mxu0 0.0
    %875 = vmatprep.subr.mxu0 0.0
    %876 = vmatpush1.msra.mxu0 0.0
    %877 = vmatprep.subr.mxu0 0.0
    %878 = vmatpush1.msra.mxu0 0.0
    %879 = vmatprep.subr.mxu0 0.0
    %880 = vmatpush1.msra.mxu0 0.0
    %881 = vmatprep.subr.mxu0 0.0
    %882 = vmatpush1.msra.mxu0 0.0
    %883 = vmatprep.subr.mxu0 0.0
    %884 = vmatpush1.msra.mxu0 0.0
    %885 = vmatprep.subr.mxu0 0.0
    %886 = vmatpush1.msra.mxu0 0.0
    %887 = vmatprep.subr.mxu0 0.0
    %888 = vmatpush1.msra.mxu0 0.0
    %889 = vmatprep.subr.mxu0 0.0
    %890 = vmatpush1.msra.mxu0 0.0
    %891 = vmatprep.subr.mxu0 0.0
    %892 = vmatpush1.msra.mxu0 0.0
    %893 = vmatprep.mubr.f32.mxu0 0.0
    %894 = vmatmul.mubr.f32.gmra.mrb[0].mxu0 %v827
    %v895 = vpop.f32.mrb[0].mxu0
    %v896 = vadd.f32 %v824, %v895
    %v897 = vpop.f32.mrb[0].mxu0
    %898 = vdwg.mxu0
    %v899 = vmax.f32 %v896, 0.0
    %v900 = vld [vmem:[#allocation15] sm:$0xff]
    %v901 = vld [vmem:[#allocation15 + $0x8] sm:$0xff]
    %v902 = vld [vmem:[#allocation17] sm:$0x1]
    %v904 = vlaneseq
    %v905 = vshrl.u32 %v904, 7
    %v906 = vsub.s32 0, %v905
    %v907 = vrot.slane %v902, %v906
    %v910 = vsel %vm160, %v899, 0
    %912 = vmatprep.subr.mxu0 0.0
    %913 = vmatpush1.msra.mxu0 %v900
    %914 = vmatprep.subr.mxu0 0.0
    %915 = vmatpush1.msra.mxu0 %v901
    %916 = vmatprep.subr.mxu0 0.0
    %917 = vmatpush1.msra.mxu0 0.0
    %918 = vmatprep.subr.mxu0 0.0
    %919 = vmatpush1.msra.mxu0 0.0
    %920 = vmatprep.subr.mxu0 0.0
    %921 = vmatpush1.msra.mxu0 0.0
    %922 = vmatprep.subr.mxu0 0.0
    %923 = vmatpush1.msra.mxu0 0.0
    %924 = vmatprep.subr.mxu0 0.0
    %925 = vmatpush1.msra.mxu0 0.0
    %926 = vmatprep.subr.mxu0 0.0
    %927 = vmatpush1.msra.mxu0 0.0
    %928 = vmatprep.subr.mxu0 0.0
    %929 = vmatpush1.msra.mxu0 0.0
    %930 = vmatprep.subr.mxu0 0.0
    %931 = vmatpush1.msra.mxu0 0.0
    %932 = vmatprep.subr.mxu0 0.0
    %933 = vmatpush1.msra.mxu0 0.0
    %934 = vmatprep.subr.mxu0 0.0
    %935 = vmatpush1.msra.mxu0 0.0
    %936 = vmatprep.subr.mxu0 0.0
    %937 = vmatpush1.msra.mxu0 0.0
    %938 = vmatprep.subr.mxu0 0.0
    %939 = vmatpush1.msra.mxu0 0.0
    %940 = vmatprep.subr.mxu0 0.0
    %941 = vmatpush1.msra.mxu0 0.0
    %942 = vmatprep.subr.mxu0 0.0
    %943 = vmatpush1.msra.mxu0 0.0
    %944 = vmatprep.subr.mxu0 0.0
    %945 = vmatpush1.msra.mxu0 0.0
    %946 = vmatprep.subr.mxu0 0.0
    %947 = vmatpush1.msra.mxu0 0.0
    %948 = vmatprep.subr.mxu0 0.0
    %949 = vmatpush1.msra.mxu0 0.0
    %950 = vmatprep.subr.mxu0 0.0
    %951 = vmatpush1.msra.mxu0 0.0
    %952 = vmatprep.subr.mxu0 0.0
    %953 = vmatpush1.msra.mxu0 0.0
    %954 = vmatprep.subr.mxu0 0.0
    %955 = vmatpush1.msra.mxu0 0.0
    %956 = vmatprep.subr.mxu0 0.0
    %957 = vmatpush1.msra.mxu0 0.0
    %958 = vmatprep.subr.mxu0 0.0
    %959 = vmatpush1.msra.mxu0 0.0
    %960 = vmatprep.subr.mxu0 0.0
    %961 = vmatpush1.msra.mxu0 0.0
    %962 = vmatprep.subr.mxu0 0.0
    %963 = vmatpush1.msra.mxu0 0.0
    %964 = vmatprep.subr.mxu0 0.0
    %965 = vmatpush1.msra.mxu0 0.0
    %966 = vmatprep.subr.mxu0 0.0
    %967 = vmatpush1.msra.mxu0 0.0
    %968 = vmatprep.subr.mxu0 0.0
    %969 = vmatpush1.msra.mxu0 0.0
    %970 = vmatprep.subr.mxu0 0.0
    %971 = vmatpush1.msra.mxu0 0.0
    %972 = vmatprep.subr.mxu0 0.0
    %973 = vmatpush1.msra.mxu0 0.0
    %974 = vmatprep.subr.mxu0 0.0
    %975 = vmatpush1.msra.mxu0 0.0
    %976 = vmatprep.mubr.f32.mxu0 0.0
    %977 = vmatmul.mubr.f32.gmra.mrb[0].mxu0 %v910
    %v978 = vpop.f32.mrb[0].mxu0
    %v979 = vadd.f32 %v907, %v978
    %v980 = vpop.f32.mrb[0].mxu0
    %981 = vdwg.mxu0
    %vm982 = vcmask 74752
    %983 = vst.msk [vmem:[#allocation18] sm:$0x3] %vm982, %v979
    // Predicated region
    $region104: #{behavioral_pattern_lstm_pallas.1} parent=1 // pred_check
      _
    $region105: #{behavioral_pattern_lstm_pallas.1} parent=1 // pred_check_branch
      %985 = sbr.rel (0) target = $region107
    $region106: #{behavioral_pattern_lstm_pallas.1} parent=1 // pred_region
      %s987 = ssub.s32 32, 32
      %988 = vsyncadd [#allocation8], %s987
      %s990 = sshll.u32 [#allocation18], 4
      %s991 = int_to_ptr.vmem [resolvable:$true] %s990
      %993 = dma.vmem_to_hbm [thread:$0]  %s991, 32, %s15, [#allocation8]
    $region107: #{behavioral_pattern_lstm_pallas.1} parent=1 // pred_fallthru
      _
    // Predicated region
    $region108: #{behavioral_pattern_lstm_pallas.1} parent=1 // pred_check
      _
    $region109: #{behavioral_pattern_lstm_pallas.1} parent=1 // pred_check_branch
      %995 = sbr.rel (0) target = $region111
    $region110: #{behavioral_pattern_lstm_pallas.1} parent=1 // pred_region
      %s997 = ssub.s32 32, 32
      %998 = vsyncadd [#allocation20], %s997
      %s1000 = sshll.u32 [#allocation19], 4
      %s1001 = int_to_ptr.vmem [resolvable:$true] %s1000
      %1003 = dma.vmem_to_hbm [thread:$0]  %s1001, 32, %s16, [#allocation20]
    $region111: #{behavioral_pattern_lstm_pallas.1} parent=1 // pred_fallthru
      _
    // Predicated region
    $region112: #{behavioral_pattern_lstm_pallas.1} parent=1 // pred_check
      _
    $region113: #{behavioral_pattern_lstm_pallas.1} parent=1 // pred_check_branch
      %1005 = sbr.rel (0) target = $region115
    $region114: #{behavioral_pattern_lstm_pallas.1} parent=1 // pred_region
      %1006 = dma.done [#allocation8], 32
    $region115: #{behavioral_pattern_lstm_pallas.1} parent=1 // pred_fallthru
      _
    // Predicated region
    $region116: #{behavioral_pattern_lstm_pallas.1} parent=1 // pred_check
      _
    $region117: #{behavioral_pattern_lstm_pallas.1} parent=1 // pred_check_branch
      %1008 = sbr.rel (0) target = $region119
    $region118: #{behavioral_pattern_lstm_pallas.1} parent=1 // pred_region
      %1009 = dma.done [#allocation20], 32
    $region119: #{behavioral_pattern_lstm_pallas.1} parent=1 // pred_fallthru
      _
    %1010 = vsyncpa [#allocation7], 1
    %1011 = vsyncpa [#allocation10], 1
    %1012 = vsyncpa [#allocation13], 1
    %1013 = vsyncpa [#allocation16], 1
    %1014 = vsyncpa [#allocation8], 1
    %1015 = vsyncpa [#allocation20], 1

</llo_original>
